<compile_context>
chip_gen: v7x
topology: tpu7x:2x2x1
jax: 0.10.0
libtpu: 0.0.40
codegen_flags: <defaults>
</compile_context>

<pallas_src>
import functools
import math

import jax
import jax.numpy as jnp
from jax import lax
from jax.experimental import pallas as pl
from jax.experimental.pallas import tpu as pltpu

# Raised above the 16 MiB (v5e) / 32 MiB (v6e, v7x) scoped-VMEM defaults so the
# weight-resident projection keeps large M tiles; the invariant weight block is
# single-buffered so actual usage stays well below this on v7x (64 MiB phys).
_VMEM_LIMIT_BYTES = 64 * 1024 * 1024
_M_TILE = 256        # projection rows per grid step (mult. of 8; >=2 steps for v7x TCs)
_Q_TILE = 256        # query-axis tile for long sequences (T > 512)
_TRANS_B = (((1,), (1,)), ((), ()))   # q @ k^T : contract the last dim of both


# ----------------------------------------------------------------------------
# Linear kernel: y = x @ W + b.  Grid over M tiles, weight block batch-invariant.
# ----------------------------------------------------------------------------
def _linear_kernel(x_ref, w_ref, b_ref, o_ref):
    acc = jnp.dot(x_ref[...], w_ref[...], preferred_element_type=jnp.float32)
    o_ref[...] = (acc + b_ref[...].astype(jnp.float32)).astype(o_ref.dtype)


def _linear(x2d, w, b, out_dtype):
    """x2d: (M, K), w: (K, N), b: (1, N)  ->  (M, N)."""
    M, K = x2d.shape
    N = w.shape[1]
    tm = _M_TILE if M >= _M_TILE else M          # mult-of-8 tile or full extent
    grid = (pl.cdiv(M, tm),)                     # ragged tail blocks are masked
    itemsize = jnp.dtype(x2d.dtype).itemsize
    cost = pl.CostEstimate(
        flops=int(2 * M * K * N),
        transcendentals=0,
        bytes_accessed=int((M * K + K * N + N + M * N) * itemsize),
    )
    # Batch-invariant weight/bias: constant index_map (fetched once) and a
    # single VMEM buffer instead of the default double buffer (v7x VMEM budget).
    w_spec = pl.BlockSpec((K, N), lambda i: (0, 0), pipeline_mode=pl.Buffered(1))
    b_spec = pl.BlockSpec((1, N), lambda i: (0, 0), pipeline_mode=pl.Buffered(1))
    return pl.pallas_call(
        _linear_kernel,
        out_shape=jax.ShapeDtypeStruct((M, N), out_dtype),
        grid_spec=pltpu.PrefetchScalarGridSpec(
            num_scalar_prefetch=0,
            grid=grid,
            in_specs=[pl.BlockSpec((tm, K), lambda i: (i, 0)), w_spec, b_spec],
            out_specs=pl.BlockSpec((tm, N), lambda i: (i, 0)),
        ),
        compiler_params=pltpu.CompilerParams(
            dimension_semantics=("parallel",),
            vmem_limit_bytes=_VMEM_LIMIT_BYTES,
        ),
        cost_estimate=cost,
    )(x2d, w, b)


# ----------------------------------------------------------------------------
# Attention core: grid (B, head_blocks, q_tiles); reads q/k/v column slabs of
# the fused QKV buffer and writes ctx directly in (B, T, D) layout.
# ----------------------------------------------------------------------------
def _make_attn_kernel(heads_per_step, head_dim, k_base, v_base, scale, approx,
                      masked):
    def kernel(q_ref, k_ref, v_ref, *rest):
        if masked:
            mask_ref, o_ref = rest
            m = mask_ref[0]                      # (tq, S) float32
        else:
            (o_ref,) = rest
            m = None
        q = q_ref[0]                             # (tq, Cq)
        k = k_ref[0]                             # (S,  Ck)
        v = v_ref[0]                             # (S,  Cv)
        parts = []
        for h in range(heads_per_step):          # static unroll (1 or 2 typically)
            lo = h * head_dim
            qh = q[:, lo:lo + head_dim] * scale  # scale hidden under the MXU
            kh = k[:, k_base + lo:k_base + lo + head_dim]
            vh = v[:, v_base + lo:v_base + lo + head_dim]
            s = lax.dot_general(qh, kh, _TRANS_B,
                                preferred_element_type=jnp.float32)    # (tq, S)
            if m is not None:
                s = s + m
            s_max = jnp.max(s, axis=-1, keepdims=True)
            e = jnp.exp(s - s_max)
            denom = jnp.sum(e, axis=-1, keepdims=True)
            ctx = jnp.dot(e.astype(vh.dtype), vh,
                          preferred_element_type=jnp.float32)          # (tq, hd)
            # Deferred normalization: (tq, hd) multiply instead of (tq, S) divide.
            parts.append(ctx * pl.reciprocal(denom, approx=approx))
        out = parts[0] if len(parts) == 1 else jnp.concatenate(parts, axis=-1)
        o_ref[0] = out.astype(o_ref.dtype)       # single lane-dense store
    return kernel


def _attention_core(qkv3, mask, *, num_heads, scale, out_dtype, approx):
    """qkv3: (B, T, 3D) fused QKV;  mask: None or (Bm, T, S) f32  ->  (B, T, D)."""
    B, T, threeD = qkv3.shape
    D = threeD // 3
    H = num_heads
    hd = D // H
    S = T
    itemsize = jnp.dtype(qkv3.dtype).itemsize

    tq = T if T <= 512 else _Q_TILE
    TQ = pl.cdiv(T, tq)

    # Heads per step = smallest count whose column slab is a multiple of 128 lanes.
    hpb = 128 // math.gcd(hd, 128)
    if hpb <= H and H % hpb == 0:
        # Lane-dense path: column-sliced q/k/v slabs of width c = hpb*hd.
        c = hpb * hd
        HB = H // hpb
        k_base, v_base = 0, 0
        q_spec = pl.BlockSpec((1, tq, c), lambda b, hb, ti: (b, ti, hb))
        k_spec = pl.BlockSpec((1, T, c), lambda b, hb, ti: (b, 0, HB + hb))
        v_spec = pl.BlockSpec((1, T, c), lambda b, hb, ti: (b, 0, 2 * HB + hb))
        o_spec = pl.BlockSpec((1, tq, c), lambda b, hb, ti: (b, ti, hb))
        heads_per_step = hpb
    else:
        # Fallback for tiny models (H*hd < 128): full-width blocks, all heads/step.
        HB = 1
        k_base, v_base = D, 2 * D
        q_spec = pl.BlockSpec((1, tq, threeD), lambda b, hb, ti: (b, ti, 0))
        k_spec = pl.BlockSpec((1, T, threeD), lambda b, hb, ti: (b, 0, 0))
        v_spec = pl.BlockSpec((1, T, threeD), lambda b, hb, ti: (b, 0, 0))
        o_spec = pl.BlockSpec((1, tq, D), lambda b, hb, ti: (b, ti, 0))
        heads_per_step = H

    in_specs = [q_spec, k_spec, v_spec]
    inputs = [qkv3, qkv3, qkv3]
    if mask is not None:
        if mask.shape[0] == 1:   # batch-shared mask
            m_spec = pl.BlockSpec((1, tq, S), lambda b, hb, ti: (0, ti, 0))
        else:
            m_spec = pl.BlockSpec((1, tq, S), lambda b, hb, ti: (b, ti, 0))
        in_specs.append(m_spec)
        inputs.append(mask)

    kernel = _make_attn_kernel(heads_per_step, hd, k_base, v_base, scale, approx,
                               mask is not None)
    cost = pl.CostEstimate(
        flops=int(4 * B * H * T * S * hd),
        transcendentals=int(B * H * T * S),
        bytes_accessed=int(4 * B * T * D * itemsize
                           + (0 if mask is None else int(mask.size) * 4)),
    )
    return pl.pallas_call(
        kernel,
        out_shape=jax.ShapeDtypeStruct((B, T, D), out_dtype),
        grid_spec=pltpu.PrefetchScalarGridSpec(
            num_scalar_prefetch=0,
            grid=(B, HB, TQ),        # q-tiles innermost: k/v blocks stay resident
            in_specs=in_specs,
            out_specs=o_spec,
        ),
        compiler_params=pltpu.CompilerParams(
            dimension_semantics=("parallel", "parallel", "parallel"),
            vmem_limit_bytes=_VMEM_LIMIT_BYTES,
        ),
        cost_estimate=cost,
    )(*inputs)


# ----------------------------------------------------------------------------
# Parameter prep (done once, outside the per-call path) + full forward.
# ----------------------------------------------------------------------------
def prepare_params(wq, bq, wk, bk, wv, bv, wo, bo, compute_dtype=jnp.float32):
    """Fuse QKV weights once.  Weights are PyTorch nn.Linear layout (out, in)."""
    cdt = compute_dtype
    w_in = jnp.concatenate([wq.T, wk.T, wv.T], axis=1).astype(cdt)      # (D, 3D)
    b_in = jnp.concatenate([bq, bk, bv]).reshape(1, -1).astype(cdt)     # (1, 3D)
    w_out = wo.T.astype(cdt)                                            # (D, D)
    b_out = bo.reshape(1, -1).astype(cdt)                               # (1, D)
    return w_in, b_in, w_out, b_out


@functools.partial(jax.jit, static_argnames=("num_heads", "compute_dtype"))
def clip_attention_fwd(hidden_states, w_in, b_in, w_out, b_out,
                       attention_mask=None, causal_attention_mask=None,
                       *, num_heads, compute_dtype=jnp.float32):
    """CLIPAttention forward (eval mode).  hidden_states: (B, T, D)."""
    B, T, D = hidden_states.shape
    H = num_heads
    hd = D // H
    scale = float(hd) ** -0.5
    out_dtype = hidden_states.dtype
    cdt = compute_dtype
    approx = jnp.dtype(cdt) != jnp.dtype(jnp.float32)   # exact recip on f32 path

    # 1) Fused QKV projection over the batch-flattened token axis.
    x2d = hidden_states.reshape(B * T, D).astype(cdt)
    qkv = _linear(x2d, w_in, b_in, out_dtype=cdt)        # (B*T, 3D)
    qkv3 = qkv.reshape(B, T, 3 * D)                      # free metadata reshape

    # 2) Additive masks (HF layout (B|1, 1, T, S)); broadcast explicitly.
    mask = None
    if causal_attention_mask is not None:
        mask = jnp.broadcast_to(causal_attention_mask.astype(jnp.float32),
                                (B, 1, T, T))
    if attention_mask is not None:
        am = jnp.broadcast_to(attention_mask.astype(jnp.float32), (B, 1, T, T))
        mask = am if mask is None else mask + am
    if mask is not None:
        mask = mask.reshape(B, T, T)

    # 3) Attention core: no head transposes — ctx comes out in (B, T, D) layout.
    ctx = _attention_core(qkv3, mask, num_heads=H, scale=scale,
                          out_dtype=cdt, approx=approx)  # (B, T, D)

    # 4) Output projection.
    out = _linear(ctx.reshape(B * T, D), w_out, b_out, out_dtype=out_dtype)
    return out.reshape(B, T, D)


# ----------------------------------------------------------------------------
# Pure-JAX reference mirroring the PyTorch forward (eval mode, no dropout).
# ----------------------------------------------------------------------------
def reference(hidden_states, wq, bq, wk, bk, wv, bv, wo, bo,
              attention_mask=None, causal_attention_mask=None, *, num_heads):
    hp = lax.Precision.HIGHEST
    B, T, D = hidden_states.shape
    H = num_heads
    hd = D // H
    scale = hd ** -0.5

    def lin(x, w, b):  # PyTorch Linear: y = x @ W^T + b
        return jnp.einsum("btd,ed->bte", x, w, precision=hp) + b

    q = lin(hidden_states, wq, bq) * scale
    k = lin(hidden_states, wk, bk)
    v = lin(hidden_states, wv, bv)

    def shp(t):
        return t.reshape(B, T, H, hd).transpose(0, 2, 1, 3)

    q, k, v = shp(q), shp(k), shp(v)
    s = jnp.einsum("bhtd,bhsd->bhts", q, k, precision=hp)
    if causal_attention_mask is not None:
        s = s + causal_attention_mask
    if attention_mask is not None:
        s = s + attention_mask
    p = jax.nn.softmax(s, axis=-1)
    ctx = jnp.einsum("bhts,bhsd->bhtd", p, v, precision=hp)
    ctx = ctx.transpose(0, 2, 1, 3).reshape(B, T, D)
    return jnp.einsum("btd,ed->bte", ctx, wo, precision=hp) + bo


def _check(name, out, ref, atol, rtol):
    out32 = out.astype(jnp.float32)
    err = float(jnp.max(jnp.abs(out32 - ref)))
    assert jnp.allclose(out32, ref, atol=atol, rtol=rtol), \
        f"{name}: max abs err {err}"


if __name__ == "__main__":
    # ---- config 1: tiny shapes (exercises the full-width fallback path) ----
    batch, seq, hidden, heads = 2, 8, 32, 4
    key = jax.random.PRNGKey(0)
    ks = jax.random.split(key, 9)
    x = jax.random.normal(ks[0], (batch, seq, hidden), dtype=jnp.float32)

    wq, wk_, wv, wo = (jax.random.normal(k, (hidden, hidden), jnp.float32) * 0.2
                       for k in ks[1:5])
    bq, bk_, bv, bo = (jax.random.normal(k, (hidden,), jnp.float32) * 0.2
                       for k in ks[5:9])

    params = prepare_params(wq, bq, wk_, bk_, wv, bv, wo, bo)

    # f32, no mask
    out = jax.block_until_ready(clip_attention_fwd(x, *params, num_heads=heads))
    ref = reference(x, wq, bq, wk_, bk_, wv, bv, wo, bo, num_heads=heads)
    assert out.shape == (batch, seq, hidden), out.shape
    _check("f32/no-mask", out, ref, 2e-3, 2e-3)

    # f32, causal mask in HF layout (B, 1, T, S)
    causal = jnp.triu(jnp.full((seq, seq), -1e9, dtype=jnp.float32), k=1)
    causal = jnp.broadcast_to(causal[None, None], (batch, 1, seq, seq))
    out_m = jax.block_until_ready(
        clip_attention_fwd(x, *params, causal_attention_mask=causal,
                           num_heads=heads))
    ref_m = reference(x, wq, bq, wk_, bk_, wv, bv, wo, bo,
                      causal_attention_mask=causal, num_heads=heads)
    _check("f32/causal", out_m, ref_m, 2e-3, 2e-3)

    # bf16 compute path (recommended default on v6e/v7x), f32 accumulation
    params_bf = prepare_params(wq, bq, wk_, bk_, wv, bv, wo, bo,
                               compute_dtype=jnp.bfloat16)
    out_bf = jax.block_until_ready(
        clip_attention_fwd(x, *params_bf, num_heads=heads,
                           compute_dtype=jnp.bfloat16))
    _check("bf16/no-mask", out_bf, ref, 1e-1, 1e-1)

    # ---- config 2: head_dim=64 -> lane-dense 128-column slab (2 heads/step) ----
    b2, s2, h2, nh2 = 2, 16, 128, 2
    k2 = jax.random.split(jax.random.PRNGKey(1), 9)
    x2 = jax.random.normal(k2[0], (b2, s2, h2), dtype=jnp.float32)
    wq2, wk2, wv2, wo2 = (jax.random.normal(k, (h2, h2), jnp.float32) * 0.05
                          for k in k2[1:5])
    bq2, bk2, bv2, bo2 = (jax.random.normal(k, (h2,), jnp.float32) * 0.05
                          for k in k2[5:9])
    params2 = prepare_params(wq2, bq2, wk2, bk2, wv2, bv2, wo2, bo2)
    out2 = jax.block_until_ready(clip_attention_fwd(x2, *params2, num_heads=nh2))
    ref2 = reference(x2, wq2, bq2, wk2, bk2, wv2, bv2, wo2, bo2, num_heads=nh2)
    _check("f32/lane-dense", out2, ref2, 2e-3, 2e-3)

    print("KERNEL_OK")
</pallas_src>

<mosaic_0001>
module attributes {stable_mosaic.version = 11 : i64} {
  func.func @_linear_kernel(%arg0: i32, %arg1: memref<16x32xf32, #tpu.memory_space<vmem>>, %arg2: memref<32x32xf32, #tpu.memory_space<vmem>>, %arg3: memref<1x32xf32, #tpu.memory_space<vmem>>, %arg4: memref<16x32xf32, #tpu.memory_space<vmem>>) attributes {dimension_semantics = [#tpu.dimension_semantics<parallel>], iteration_bounds = array<i64: 1>, scalar_prefetch = 0 : i64, scratch_operands = 0 : i64, tpu.core_type = #tpu.core_type<tc>, window_params = [{transform_indices = @transform_0, window_bounds = array<i64: 16, 32>}, {pipeline_mode = #tpu.pipeline_mode<synchronous>, transform_indices = @transform_1, window_bounds = array<i64: 32, 32>}, {pipeline_mode = #tpu.pipeline_mode<synchronous>, transform_indices = @transform_2, window_bounds = array<i64: 1, 32>}, {transform_indices = @transform_3, window_bounds = array<i64: 16, 32>}]} {
    %c0 = arith.constant 0 : index
    %c0_0 = arith.constant 0 : index
    %0 = vector.load %arg1[%c0, %c0_0] : memref<16x32xf32, #tpu.memory_space<vmem>>, vector<16x32xf32>
    %c0_1 = arith.constant 0 : index
    %c0_2 = arith.constant 0 : index
    %1 = vector.load %arg2[%c0_1, %c0_2] : memref<32x32xf32, #tpu.memory_space<vmem>>, vector<32x32xf32>
    %cst = arith.constant dense<0.000000e+00> : vector<16x32xf32>
    %2 = tpu.matmul %0, %1, %cst {dimension_numbers = #tpu.dot_dimension_numbers<[1], [0], [0], [1], [0, 0, 1, 1], [], []>} : vector<16x32xf32>, vector<32x32xf32>, vector<16x32xf32> -> vector<16x32xf32>
    %c0_3 = arith.constant 0 : index
    %c0_4 = arith.constant 0 : index
    %3 = vector.load %arg3[%c0_3, %c0_4] : memref<1x32xf32, #tpu.memory_space<vmem>>, vector<1x32xf32>
    %4 = vector.broadcast %3 : vector<1x32xf32> to vector<16x32xf32>
    %5 = arith.addf %2, %4 : vector<16x32xf32>
    %c0_5 = arith.constant 0 : index
    %c0_6 = arith.constant 0 : index
    %6 = vector.load %arg4[%c0_5, %c0_6] : memref<16x32xf32, #tpu.memory_space<vmem>>, vector<16x32xf32>
    tpu.vector_store %arg4[%c0_5, %c0_6], %5 {strides = array<i32>} : memref<16x32xf32, #tpu.memory_space<vmem>>, vector<16x32xf32>,
    return
  }
  func.func @transform_0(%arg0: i32) -> (i32, i32) {
    %c0_i32 = arith.constant 0 : i32
    %c0_i32_0 = arith.constant 0 : i32
    return %arg0, %c0_i32 : i32, i32
  }
  func.func @transform_1(%arg0: i32) -> (i32, i32) {
    %c0_i32 = arith.constant 0 : i32
    %c0_i32_0 = arith.constant 0 : i32
    %c0_i32_1 = arith.constant 0 : i32
    return %c0_i32, %c0_i32_0 : i32, i32
  }
  func.func @transform_2(%arg0: i32) -> (i32, i32) {
    %c0_i32 = arith.constant 0 : i32
    %c0_i32_0 = arith.constant 0 : i32
    %c0_i32_1 = arith.constant 0 : i32
    return %c0_i32, %c0_i32_0 : i32, i32
  }
  func.func @transform_3(%arg0: i32) -> (i32, i32) {
    %c0_i32 = arith.constant 0 : i32
    %c0_i32_0 = arith.constant 0 : i32
    return %arg0, %c0_i32 : i32, i32
  }
}

module attributes {stable_mosaic.version = 11 : i64} {
  func.func @_linear_kernel(%arg0: i32, %arg1: memref<16x32xf32, #tpu.memory_space<vmem>>, %arg2: memref<32x96xf32, #tpu.memory_space<vmem>>, %arg3: memref<1x96xf32, #tpu.memory_space<vmem>>, %arg4: memref<16x96xf32, #tpu.memory_space<vmem>>) attributes {dimension_semantics = [#tpu.dimension_semantics<parallel>], iteration_bounds = array<i64: 1>, scalar_prefetch = 0 : i64, scratch_operands = 0 : i64, tpu.core_type = #tpu.core_type<tc>, window_params = [{transform_indices = @transform_0, window_bounds = array<i64: 16, 32>}, {pipeline_mode = #tpu.pipeline_mode<synchronous>, transform_indices = @transform_1, window_bounds = array<i64: 32, 96>}, {pipeline_mode = #tpu.pipeline_mode<synchronous>, transform_indices = @transform_2, window_bounds = array<i64: 1, 96>}, {transform_indices = @transform_3, window_bounds = array<i64: 16, 96>}]} {
    %c0 = arith.constant 0 : index
    %c0_0 = arith.constant 0 : index
    %0 = vector.load %arg1[%c0, %c0_0] : memref<16x32xf32, #tpu.memory_space<vmem>>, vector<16x32xf32>
    %c0_1 = arith.constant 0 : index
    %c0_2 = arith.constant 0 : index
    %1 = vector.load %arg2[%c0_1, %c0_2] : memref<32x96xf32, #tpu.memory_space<vmem>>, vector<32x96xf32>
    %cst = arith.constant dense<0.000000e+00> : vector<16x96xf32>
    %2 = tpu.matmul %0, %1, %cst {dimension_numbers = #tpu.dot_dimension_numbers<[1], [0], [0], [1], [0, 0, 1, 1], [], []>} : vector<16x32xf32>, vector<32x96xf32>, vector<16x96xf32> -> vector<16x96xf32>
    %c0_3 = arith.constant 0 : index
    %c0_4 = arith.constant 0 : index
    %3 = vector.load %arg3[%c0_3, %c0_4] : memref<1x96xf32, #tpu.memory_space<vmem>>, vector<1x96xf32>
    %4 = vector.broadcast %3 : vector<1x96xf32> to vector<16x96xf32>
    %5 = arith.addf %2, %4 : vector<16x96xf32>
    %c0_5 = arith.constant 0 : index
    %c0_6 = arith.constant 0 : index
    %6 = vector.load %arg4[%c0_5, %c0_6] : memref<16x96xf32, #tpu.memory_space<vmem>>, vector<16x96xf32>
    tpu.vector_store %arg4[%c0_5, %c0_6], %5 {strides = array<i32>} : memref<16x96xf32, #tpu.memory_space<vmem>>, vector<16x96xf32>,
    return
  }
  func.func @transform_0(%arg0: i32) -> (i32, i32) {
    %c0_i32 = arith.constant 0 : i32
    %c0_i32_0 = arith.constant 0 : i32
    return %arg0, %c0_i32 : i32, i32
  }
  func.func @transform_1(%arg0: i32) -> (i32, i32) {
    %c0_i32 = arith.constant 0 : i32
    %c0_i32_0 = arith.constant 0 : i32
    %c0_i32_1 = arith.constant 0 : i32
    return %c0_i32, %c0_i32_0 : i32, i32
  }
  func.func @transform_2(%arg0: i32) -> (i32, i32) {
    %c0_i32 = arith.constant 0 : i32
    %c0_i32_0 = arith.constant 0 : i32
    %c0_i32_1 = arith.constant 0 : i32
    return %c0_i32, %c0_i32_0 : i32, i32
  }
  func.func @transform_3(%arg0: i32) -> (i32, i32) {
    %c0_i32 = arith.constant 0 : i32
    %c0_i32_0 = arith.constant 0 : i32
    return %arg0, %c0_i32 : i32, i32
  }
}

module attributes {stable_mosaic.version = 11 : i64} {
  func.func @kernel(%arg0: i32, %arg1: i32, %arg2: i32, %arg3: memref<1x8x96xf32, #tpu.memory_space<vmem>>, %arg4: memref<1x8x96xf32, #tpu.memory_space<vmem>>, %arg5: memref<1x8x96xf32, #tpu.memory_space<vmem>>, %arg6: memref<1x8x32xf32, #tpu.memory_space<vmem>>) attributes {dimension_semantics = [#tpu.dimension_semantics<parallel>, #tpu.dimension_semantics<parallel>, #tpu.dimension_semantics<parallel>], iteration_bounds = array<i64: 2, 1, 1>, scalar_prefetch = 0 : i64, scratch_operands = 0 : i64, tpu.core_type = #tpu.core_type<tc>, window_params = [{transform_indices = @transform_0, window_bounds = array<i64: 1, 8, 96>}, {transform_indices = @transform_1, window_bounds = array<i64: 1, 8, 96>}, {transform_indices = @transform_2, window_bounds = array<i64: 1, 8, 96>}, {transform_indices = @transform_3, window_bounds = array<i64: 1, 8, 32>}]} {
    %c0 = arith.constant 0 : index
    %c0_0 = arith.constant 0 : index
    %c0_1 = arith.constant 0 : index
    %0 = vector.load %arg3[%c0, %c0_0, %c0_1] : memref<1x8x96xf32, #tpu.memory_space<vmem>>, vector<1x8x96xf32>
    %1 = vector.shape_cast %0 : vector<1x8x96xf32> to vector<8x96xf32>
    %c0_2 = arith.constant 0 : index
    %c0_3 = arith.constant 0 : index
    %c0_4 = arith.constant 0 : index
    %2 = vector.load %arg4[%c0_2, %c0_3, %c0_4] : memref<1x8x96xf32, #tpu.memory_space<vmem>>, vector<1x8x96xf32>
    %3 = vector.shape_cast %2 : vector<1x8x96xf32> to vector<8x96xf32>
    %c0_5 = arith.constant 0 : index
    %c0_6 = arith.constant 0 : index
    %c0_7 = arith.constant 0 : index
    %4 = vector.load %arg5[%c0_5, %c0_6, %c0_7] : memref<1x8x96xf32, #tpu.memory_space<vmem>>, vector<1x8x96xf32>
    %5 = vector.shape_cast %4 : vector<1x8x96xf32> to vector<8x96xf32>
    %6 = vector.extract_strided_slice %1 {offsets = [0, 0], sizes = [8, 8], strides = [1, 1]} : vector<8x96xf32> to vector<8x8xf32>
    %cst = arith.constant 0.353553385 : f32
    %7 = vector.broadcast %cst : f32 to vector<8x8xf32>
    %8 = arith.mulf %6, %7 : vector<8x8xf32>
    %9 = vector.extract_strided_slice %3 {offsets = [0, 32], sizes = [8, 8], strides = [1, 1]} : vector<8x96xf32> to vector<8x8xf32>
    %10 = vector.extract_strided_slice %5 {offsets = [0, 64], sizes = [8, 8], strides = [1, 1]} : vector<8x96xf32> to vector<8x8xf32>
    %cst_8 = arith.constant dense<0.000000e+00> : vector<8x8xf32>
    %11 = tpu.matmul %8, %9, %cst_8 {dimension_numbers = #tpu.dot_dimension_numbers<[1], [1], [0], [0], [0, 0, 1, 0], [], []>} : vector<8x8xf32>, vector<8x8xf32>, vector<8x8xf32> -> vector<8x8xf32>
    %cst_9 = arith.constant dense<0xFF800000> : vector<8xf32>
    %12 = vector.multi_reduction <maximumf>, %11, %cst_9 [1] : vector<8x8xf32> to vector<8xf32>
    %13 = vector.shape_cast %12 : vector<8xf32> to vector<8x1xf32>
    %14 = vector.broadcast %13 : vector<8x1xf32> to vector<8x8xf32>
    %15 = arith.subf %11, %14 : vector<8x8xf32>
    %16 = math.exp %15 : vector<8x8xf32>
    %cst_10 = arith.constant dense<0.000000e+00> : vector<8xf32>
    %17 = vector.multi_reduction <add>, %16, %cst_10 [1] : vector<8x8xf32> to vector<8xf32>
    %18 = vector.shape_cast %17 : vector<8xf32> to vector<8x1xf32>
    %cst_11 = arith.constant dense<0.000000e+00> : vector<8x8xf32>
    %19 = tpu.matmul %16, %10, %cst_11 {dimension_numbers = #tpu.dot_dimension_numbers<[1], [0], [0], [1], [0, 0, 1, 1], [], []>} : vector<8x8xf32>, vector<8x8xf32>, vector<8x8xf32> -> vector<8x8xf32>
    %20 = tpu.reciprocal %18 : vector<8x1xf32> -> vector<8x1xf32>
    %21 = vector.broadcast %20 : vector<8x1xf32> to vector<8x8xf32>
    %22 = arith.mulf %19, %21 : vector<8x8xf32>
    %23 = vector.extract_strided_slice %1 {offsets = [0, 8], sizes = [8, 8], strides = [1, 1]} : vector<8x96xf32> to vector<8x8xf32>
    %cst_12 = arith.constant 0.353553385 : f32
    %24 = vector.broadcast %cst_12 : f32 to vector<8x8xf32>
    %25 = arith.mulf %23, %24 : vector<8x8xf32>
    %26 = vector.extract_strided_slice %3 {offsets = [0, 40], sizes = [8, 8], strides = [1, 1]} : vector<8x96xf32> to vector<8x8xf32>
    %27 = vector.extract_strided_slice %5 {offsets = [0, 72], sizes = [8, 8], strides = [1, 1]} : vector<8x96xf32> to vector<8x8xf32>
    %cst_13 = arith.constant dense<0.000000e+00> : vector<8x8xf32>
    %28 = tpu.matmul %25, %26, %cst_13 {dimension_numbers = #tpu.dot_dimension_numbers<[1], [1], [0], [0], [0, 0, 1, 0], [], []>} : vector<8x8xf32>, vector<8x8xf32>, vector<8x8xf32> -> vector<8x8xf32>
    %cst_14 = arith.constant dense<0xFF800000> : vector<8xf32>
    %29 = vector.multi_reduction <maximumf>, %28, %cst_14 [1] : vector<8x8xf32> to vector<8xf32>
    %30 = vector.shape_cast %29 : vector<8xf32> to vector<8x1xf32>
    %31 = vector.broadcast %30 : vector<8x1xf32> to vector<8x8xf32>
    %32 = arith.subf %28, %31 : vector<8x8xf32>
    %33 = math.exp %32 : vector<8x8xf32>
    %cst_15 = arith.constant dense<0.000000e+00> : vector<8xf32>
    %34 = vector.multi_reduction <add>, %33, %cst_15 [1] : vector<8x8xf32> to vector<8xf32>
    %35 = vector.shape_cast %34 : vector<8xf32> to vector<8x1xf32>
    %cst_16 = arith.constant dense<0.000000e+00> : vector<8x8xf32>
    %36 = tpu.matmul %33, %27, %cst_16 {dimension_numbers = #tpu.dot_dimension_numbers<[1], [0], [0], [1], [0, 0, 1, 1], [], []>} : vector<8x8xf32>, vector<8x8xf32>, vector<8x8xf32> -> vector<8x8xf32>
    %37 = tpu.reciprocal %35 : vector<8x1xf32> -> vector<8x1xf32>
    %38 = vector.broadcast %37 : vector<8x1xf32> to vector<8x8xf32>
    %39 = arith.mulf %36, %38 : vector<8x8xf32>
    %40 = vector.extract_strided_slice %1 {offsets = [0, 16], sizes = [8, 8], strides = [1, 1]} : vector<8x96xf32> to vector<8x8xf32>
    %cst_17 = arith.constant 0.353553385 : f32
    %41 = vector.broadcast %cst_17 : f32 to vector<8x8xf32>
    %42 = arith.mulf %40, %41 : vector<8x8xf32>
    %43 = vector.extract_strided_slice %3 {offsets = [0, 48], sizes = [8, 8], strides = [1, 1]} : vector<8x96xf32> to vector<8x8xf32>
    %44 = vector.extract_strided_slice %5 {offsets = [0, 80], sizes = [8, 8], strides = [1, 1]} : vector<8x96xf32> to vector<8x8xf32>
    %cst_18 = arith.constant dense<0.000000e+00> : vector<8x8xf32>
    %45 = tpu.matmul %42, %43, %cst_18 {dimension_numbers = #tpu.dot_dimension_numbers<[1], [1], [0], [0], [0, 0, 1, 0], [], []>} : vector<8x8xf32>, vector<8x8xf32>, vector<8x8xf32> -> vector<8x8xf32>
    %cst_19 = arith.constant dense<0xFF800000> : vector<8xf32>
    %46 = vector.multi_reduction <maximumf>, %45, %cst_19 [1] : vector<8x8xf32> to vector<8xf32>
    %47 = vector.shape_cast %46 : vector<8xf32> to vector<8x1xf32>
    %48 = vector.broadcast %47 : vector<8x1xf32> to vector<8x8xf32>
    %49 = arith.subf %45, %48 : vector<8x8xf32>
    %50 = math.exp %49 : vector<8x8xf32>
    %cst_20 = arith.constant dense<0.000000e+00> : vector<8xf32>
    %51 = vector.multi_reduction <add>, %50, %cst_20 [1] : vector<8x8xf32> to vector<8xf32>
    %52 = vector.shape_cast %51 : vector<8xf32> to vector<8x1xf32>
    %cst_21 = arith.constant dense<0.000000e+00> : vector<8x8xf32>
    %53 = tpu.matmul %50, %44, %cst_21 {dimension_numbers = #tpu.dot_dimension_numbers<[1], [0], [0], [1], [0, 0, 1, 1], [], []>} : vector<8x8xf32>, vector<8x8xf32>, vector<8x8xf32> -> vector<8x8xf32>
    %54 = tpu.reciprocal %52 : vector<8x1xf32> -> vector<8x1xf32>
    %55 = vector.broadcast %54 : vector<8x1xf32> to vector<8x8xf32>
    %56 = arith.mulf %53, %55 : vector<8x8xf32>
    %57 = vector.extract_strided_slice %1 {offsets = [0, 24], sizes = [8, 8], strides = [1, 1]} : vector<8x96xf32> to vector<8x8xf32>
    %cst_22 = arith.constant 0.353553385 : f32
    %58 = vector.broadcast %cst_22 : f32 to vector<8x8xf32>
    %59 = arith.mulf %57, %58 : vector<8x8xf32>
    %60 = vector.extract_strided_slice %3 {offsets = [0, 56], sizes = [8, 8], strides = [1, 1]} : vector<8x96xf32> to vector<8x8xf32>
    %61 = vector.extract_strided_slice %5 {offsets = [0, 88], sizes = [8, 8], strides = [1, 1]} : vector<8x96xf32> to vector<8x8xf32>
    %cst_23 = arith.constant dense<0.000000e+00> : vector<8x8xf32>
    %62 = tpu.matmul %59, %60, %cst_23 {dimension_numbers = #tpu.dot_dimension_numbers<[1], [1], [0], [0], [0, 0, 1, 0], [], []>} : vector<8x8xf32>, vector<8x8xf32>, vector<8x8xf32> -> vector<8x8xf32>
    %cst_24 = arith.constant dense<0xFF800000> : vector<8xf32>
    %63 = vector.multi_reduction <maximumf>, %62, %cst_24 [1] : vector<8x8xf32> to vector<8xf32>
    %64 = vector.shape_cast %63 : vector<8xf32> to vector<8x1xf32>
    %65 = vector.broadcast %64 : vector<8x1xf32> to vector<8x8xf32>
    %66 = arith.subf %62, %65 : vector<8x8xf32>
    %67 = math.exp %66 : vector<8x8xf32>
    %cst_25 = arith.constant dense<0.000000e+00> : vector<8xf32>
    %68 = vector.multi_reduction <add>, %67, %cst_25 [1] : vector<8x8xf32> to vector<8xf32>
    %69 = vector.shape_cast %68 : vector<8xf32> to vector<8x1xf32>
    %cst_26 = arith.constant dense<0.000000e+00> : vector<8x8xf32>
    %70 = tpu.matmul %67, %61, %cst_26 {dimension_numbers = #tpu.dot_dimension_numbers<[1], [0], [0], [1], [0, 0, 1, 1], [], []>} : vector<8x8xf32>, vector<8x8xf32>, vector<8x8xf32> -> vector<8x8xf32>
    %71 = tpu.reciprocal %69 : vector<8x1xf32> -> vector<8x1xf32>
    %72 = vector.broadcast %71 : vector<8x1xf32> to vector<8x8xf32>
    %73 = arith.mulf %70, %72 : vector<8x8xf32>
    %74 = tpu.concatenate %22, %39, %56, %73 in 1 : vector<8x8xf32>, vector<8x8xf32>, vector<8x8xf32>, vector<8x8xf32> -> vector<8x32xf32>
    %c0_27 = arith.constant 0 : index
    %c0_28 = arith.constant 0 : index
    %c0_29 = arith.constant 0 : index
    %75 = vector.load %arg6[%c0_27, %c0_28, %c0_29] : memref<1x8x32xf32, #tpu.memory_space<vmem>>, vector<1x8x32xf32>
    %76 = vector.shape_cast %75 : vector<1x8x32xf32> to vector<8x32xf32>
    %77 = vector.shape_cast %74 : vector<8x32xf32> to vector<1x8x32xf32>
    tpu.vector_store %arg6[%c0_27, %c0_28, %c0_29], %77 {strides = array<i32>} : memref<1x8x32xf32, #tpu.memory_space<vmem>>, vector<1x8x32xf32>,
    return
  }
  func.func @transform_0(%arg0: i32, %arg1: i32, %arg2: i32) -> (i32, i32, i32) {
    %c0_i32 = arith.constant 0 : i32
    %c0_i32_0 = arith.constant 0 : i32
    return %arg0, %arg2, %c0_i32 : i32, i32, i32
  }
  func.func @transform_1(%arg0: i32, %arg1: i32, %arg2: i32) -> (i32, i32, i32) {
    %c0_i32 = arith.constant 0 : i32
    %c0_i32_0 = arith.constant 0 : i32
    %c0_i32_1 = arith.constant 0 : i32
    return %arg0, %c0_i32, %c0_i32_0 : i32, i32, i32
  }
  func.func @transform_2(%arg0: i32, %arg1: i32, %arg2: i32) -> (i32, i32, i32) {
    %c0_i32 = arith.constant 0 : i32
    %c0_i32_0 = arith.constant 0 : i32
    %c0_i32_1 = arith.constant 0 : i32
    return %arg0, %c0_i32, %c0_i32_0 : i32, i32, i32
  }
  func.func @transform_3(%arg0: i32, %arg1: i32, %arg2: i32) -> (i32, i32, i32) {
    %c0_i32 = arith.constant 0 : i32
    %c0_i32_0 = arith.constant 0 : i32
    return %arg0, %arg2, %c0_i32 : i32, i32, i32
  }
}

</mosaic_0001>

<llo_original>
// kernel: clip_attention_fwd.5
$region0: #{clip_attention_fwd.5}
  #allocation0 [shape = 'u32[]', space=smem, size = 0x4, offset = 0x4, fixed_abs, tag = 'smem constant byte address 0x4 - core index']
  #allocation1 [shape = 'u32[144,128]{1,0:T(1,128)}', space=vmem, size = 0x12000, scoped, tag = 'internal scratch']
  %s0 = inlined_call_operand.hbm [shape: f32[16,32], index: 0, kind: input, shape index: {}]
  %s1 = inlined_call_operand.hbm [shape: f32[32,32], index: 1, kind: input, shape index: {}]
  %s2 = inlined_call_operand.hbm [shape: f32[1,32], index: 2, kind: input, shape index: {}]
  %s3 = inlined_call_operand.hbm [shape: f32[16,32], index: 3, kind: output, shape index: {}]
  %s4 = sld [smem:[#allocation0]]
  $region34: #{clip_attention_fwd.5} parent=0
    _
  %s6 = ssub.s32 1, %s4
  %s7 = scalar_select 0, %s6, %s4
  $region1: #{clip_attention_fwd.5} parent=0
    #allocation2 [shape = 'u8[8192]{0}', space=vmem, size = 0x2000, scoped, tag = 'input window, operand 0, single buffered']
    #allocation3 [shape = 's32[1]{0}', space=sflag, size = 0x4, scoped, tag = 'scoped memory for clip_attention_fwd.5']
    #allocation4 [shape = 's32[1]{0}', space=sflag, size = 0x4, scoped, tag = 'scoped memory for clip_attention_fwd.5']
    #allocation5 [shape = 'u8[16384]{0}', space=vmem, size = 0x4000, scoped, tag = 'input window, operand 1, single buffered']
    #allocation6 [shape = 's32[1]{0}', space=sflag, size = 0x4, scoped, tag = 'scoped memory for clip_attention_fwd.5']
    #allocation7 [shape = 'u8[512]{0}', space=vmem, size = 0x400, scoped, tag = 'input window, operand 2, single buffered']
    #allocation8 [shape = 'u8[8192]{0}', space=vmem, size = 0x2000, scoped, tag = 'output window, operand 0, single buffered']
    %8 = vsyncpa [#allocation3], 0
    %9 = vsyncpa [#allocation6], 0
    %10 = vsyncpa [#allocation4], 0
    // Predicated region
    $region2: #{clip_attention_fwd.5} parent=1 // pred_check
      _
    $region3: #{clip_attention_fwd.5} parent=1 // pred_check_branch
      %12 = sbr.rel (0) target = $region5
    $region4: #{clip_attention_fwd.5} parent=1 // pred_region
      %s14 = ssub.s32 256, 256
      %15 = vsyncadd [#allocation3], %s14
      %s16 = sshll.u32 [#allocation2], 4
      %s17 = int_to_ptr.vmem [resolvable:$true] %s16
      %22 = dma.hbm_to_vmem [thread:$0]  %s0, 256, %s17, [#allocation3], 128, 128, 8
    $region5: #{clip_attention_fwd.5} parent=1 // pred_fallthru
      _
    // Predicated region
    $region6: #{clip_attention_fwd.5} parent=1 // pred_check
      _
    $region7: #{clip_attention_fwd.5} parent=1 // pred_check_branch
      %24 = sbr.rel (0) target = $region9
    $region8: #{clip_attention_fwd.5} parent=1 // pred_region
      %s26 = ssub.s32 512, 512
      %27 = vsyncadd [#allocation6], %s26
      %s28 = sshll.u32 [#allocation5], 4
      %s29 = int_to_ptr.vmem [resolvable:$true] %s28
      %34 = dma.hbm_to_vmem [thread:$0]  %s1, 512, %s29, [#allocation6], 128, 128, 8
    $region9: #{clip_attention_fwd.5} parent=1 // pred_fallthru
      _
    // Predicated region
    $region10: #{clip_attention_fwd.5} parent=1 // pred_check
      _
    $region11: #{clip_attention_fwd.5} parent=1 // pred_check_branch
      %36 = sbr.rel (0) target = $region13
    $region12: #{clip_attention_fwd.5} parent=1 // pred_region
      %s38 = ssub.s32 16, 16
      %39 = vsyncadd [#allocation6], %s38
      %s41 = sshll.u32 [#allocation7], 4
      %s42 = int_to_ptr.vmem [resolvable:$true] %s41
      %44 = dma.hbm_to_vmem [thread:$0]  %s2, 16, %s42, [#allocation6]
    $region13: #{clip_attention_fwd.5} parent=1 // pred_fallthru
      _
    // Predicated region
    $region14: #{clip_attention_fwd.5} parent=1 // pred_check
      _
    $region15: #{clip_attention_fwd.5} parent=1 // pred_check_branch
      %46 = sbr.rel (0) target = $region17
    $region16: #{clip_attention_fwd.5} parent=1 // pred_region
      %47 = dma.done [#allocation3], 256
    $region17: #{clip_attention_fwd.5} parent=1 // pred_fallthru
      _
    // Predicated region
    $region18: #{clip_attention_fwd.5} parent=1 // pred_check
      _
    $region19: #{clip_attention_fwd.5} parent=1 // pred_check_branch
      %49 = sbr.rel (0) target = $region21
    $region20: #{clip_attention_fwd.5} parent=1 // pred_region
      %50 = dma.done [#allocation6], 512
    $region21: #{clip_attention_fwd.5} parent=1 // pred_fallthru
      _
    // Predicated region
    $region22: #{clip_attention_fwd.5} parent=1 // pred_check
      _
    $region23: #{clip_attention_fwd.5} parent=1 // pred_check_branch
      %52 = sbr.rel (0) target = $region25
    $region24: #{clip_attention_fwd.5} parent=1 // pred_region
      %53 = dma.done [#allocation6], 16
    $region25: #{clip_attention_fwd.5} parent=1 // pred_fallthru
      _
    %v54 = vld [vmem:[#allocation2] sm:$0xff]
    %v55 = vld [vmem:[#allocation2 + $0x8] sm:$0xff]
    %v56 = vld [vmem:[#allocation5] sm:$0xff]
    %v57 = vld [vmem:[#allocation5 + $0x8] sm:$0xff]
    %v58 = vld [vmem:[#allocation5 + $0x10] sm:$0xff]
    %v59 = vld [vmem:[#allocation5 + $0x18] sm:$0xff]
    %v60 = vld [vmem:[#allocation7] sm:$0x1]
    %v62 = vlaneseq
    %v63 = vshrl.u32 %v62, 7
    %v64 = vsub.s32 0, %v63
    %v65 = vrot.slane %v60, %v64
    %vm67 = vcmask 261120
    %v69 = vsel %vm67, %v54, 0
    %v72 = vsel %vm67, %v55, 0
    %74 = vmatprep.subr.mxu0 0.0
    %75 = vmatpush1.msra.mxu0 %v56
    %76 = vmatprep.subr.mxu0 0.0
    %77 = vmatpush1.msra.mxu0 %v57
    %78 = vmatprep.subr.mxu0 0.0
    %79 = vmatpush1.msra.mxu0 %v58
    %80 = vmatprep.subr.mxu0 0.0
    %81 = vmatpush1.msra.mxu0 %v59
    %82 = vmatprep.subr.mxu0 0.0
    %83 = vmatpush1.msra.mxu0 0.0
    %84 = vmatprep.subr.mxu0 0.0
    %85 = vmatpush1.msra.mxu0 0.0
    %86 = vmatprep.subr.mxu0 0.0
    %87 = vmatpush1.msra.mxu0 0.0
    %88 = vmatprep.subr.mxu0 0.0
    %89 = vmatpush1.msra.mxu0 0.0
    %90 = vmatprep.subr.mxu0 0.0
    %91 = vmatpush1.msra.mxu0 0.0
    %92 = vmatprep.subr.mxu0 0.0
    %93 = vmatpush1.msra.mxu0 0.0
    %94 = vmatprep.subr.mxu0 0.0
    %95 = vmatpush1.msra.mxu0 0.0
    %96 = vmatprep.subr.mxu0 0.0
    %97 = vmatpush1.msra.mxu0 0.0
    %98 = vmatprep.subr.mxu0 0.0
    %99 = vmatpush1.msra.mxu0 0.0
    %100 = vmatprep.subr.mxu0 0.0
    %101 = vmatpush1.msra.mxu0 0.0
    %102 = vmatprep.subr.mxu0 0.0
    %103 = vmatpush1.msra.mxu0 0.0
    %104 = vmatprep.subr.mxu0 0.0
    %105 = vmatpush1.msra.mxu0 0.0
    %106 = vmatprep.subr.mxu0 0.0
    %107 = vmatpush1.msra.mxu0 0.0
    %108 = vmatprep.subr.mxu0 0.0
    %109 = vmatpush1.msra.mxu0 0.0
    %110 = vmatprep.subr.mxu0 0.0
    %111 = vmatpush1.msra.mxu0 0.0
    %112 = vmatprep.subr.mxu0 0.0
    %113 = vmatpush1.msra.mxu0 0.0
    %114 = vmatprep.subr.mxu0 0.0
    %115 = vmatpush1.msra.mxu0 0.0
    %116 = vmatprep.subr.mxu0 0.0
    %117 = vmatpush1.msra.mxu0 0.0
    %118 = vmatprep.subr.mxu0 0.0
    %119 = vmatpush1.msra.mxu0 0.0
    %120 = vmatprep.subr.mxu0 0.0
    %121 = vmatpush1.msra.mxu0 0.0
    %122 = vmatprep.subr.mxu0 0.0
    %123 = vmatpush1.msra.mxu0 0.0
    %124 = vmatprep.subr.mxu0 0.0
    %125 = vmatpush1.msra.mxu0 0.0
    %126 = vmatprep.subr.mxu0 0.0
    %127 = vmatpush1.msra.mxu0 0.0
    %128 = vmatprep.subr.mxu0 0.0
    %129 = vmatpush1.msra.mxu0 0.0
    %130 = vmatprep.subr.mxu0 0.0
    %131 = vmatpush1.msra.mxu0 0.0
    %132 = vmatprep.subr.mxu0 0.0
    %133 = vmatpush1.msra.mxu0 0.0
    %134 = vmatprep.subr.mxu0 0.0
    %135 = vmatpush1.msra.mxu0 0.0
    %136 = vmatprep.subr.mxu0 0.0
    %137 = vmatpush1.msra.mxu0 0.0
    %138 = vmatprep.mubr.f32.mxu0 0.0
    %139 = vmatmul.mubr.f32.gmra.mrb[0].mxu0 %v69
    %v140 = vpop.f32.mrb[0].mxu0
    %v141 = vadd.f32 %v65, %v140
    %v142 = vpop.f32.mrb[0].mxu0
    %143 = vmatprep.mubr.f32.mxu0 0.0
    %144 = vmatmul.mubr.f32.gmra.mrb[0].mxu0 %v72
    %v145 = vpop.f32.mrb[0].mxu0
    %v146 = vadd.f32 %v65, %v145
    %v147 = vpop.f32.mrb[0].mxu0
    %148 = vdwg.mxu0
    %149 = vst.msk [vmem:[#allocation8] sm:$0xff] %vm67, %v141
    %150 = vst.msk [vmem:[#allocation8 + $0x8] sm:$0xff] %vm67, %v146
    // Predicated region
    $region26: #{clip_attention_fwd.5} parent=1 // pred_check
      _
    $region27: #{clip_attention_fwd.5} parent=1 // pred_check_branch
      %152 = sbr.rel (0) target = $region29
    $region28: #{clip_attention_fwd.5} parent=1 // pred_region
      %s154 = ssub.s32 256, 256
      %155 = vsyncadd [#allocation4], %s154
      %s156 = sshll.u32 [#allocation8], 4
      %s157 = int_to_ptr.vmem [resolvable:$true] %s156
      %162 = dma.vmem_to_hbm [thread:$0]  %s157, 256, %s3, [#allocation4], 128, 128, 8
    $region29: #{clip_attention_fwd.5} parent=1 // pred_fallthru
      _
    // Predicated region
    $region30: #{clip_attention_fwd.5} parent=1 // pred_check
      _
    $region31: #{clip_attention_fwd.5} parent=1 // pred_check_branch
      %164 = sbr.rel (0) target = $region33
    $region32: #{clip_attention_fwd.5} parent=1 // pred_region
      %165 = dma.done [#allocation4], 256
    $region33: #{clip_attention_fwd.5} parent=1 // pred_fallthru
      _
    %166 = vsyncpa [#allocation3], 1
    %167 = vsyncpa [#allocation6], 1
    %168 = vsyncpa [#allocation4], 1

// kernel: clip_attention_fwd.3
$region0: #{clip_attention_fwd.3}
  #allocation0 [shape = 'u32[]', space=smem, size = 0x4, offset = 0x4, fixed_abs, tag = 'smem constant byte address 0x4 - core index']
  #allocation1 [shape = 'u32[144,128]{1,0:T(1,128)}', space=vmem, size = 0x12000, scoped, tag = 'internal scratch']
  %s0 = inlined_call_operand.hbm [shape: f32[16,32], index: 0, kind: input, shape index: {}]
  %s1 = inlined_call_operand.hbm [shape: f32[32,96], index: 1, kind: input, shape index: {}]
  %s2 = inlined_call_operand.hbm [shape: f32[1,96], index: 2, kind: input, shape index: {}]
  %s3 = inlined_call_operand.hbm [shape: f32[16,96], index: 3, kind: output, shape index: {}]
  %s4 = sld [smem:[#allocation0]]
  $region34: #{clip_attention_fwd.3} parent=0
    _
  %s6 = ssub.s32 1, %s4
  %s7 = scalar_select 0, %s6, %s4
  $region1: #{clip_attention_fwd.3} parent=0
    #allocation2 [shape = 'u8[8192]{0}', space=vmem, size = 0x2000, scoped, tag = 'input window, operand 0, single buffered']
    #allocation3 [shape = 's32[1]{0}', space=sflag, size = 0x4, scoped, tag = 'scoped memory for clip_attention_fwd.3']
    #allocation4 [shape = 's32[1]{0}', space=sflag, size = 0x4, scoped, tag = 'scoped memory for clip_attention_fwd.3']
    #allocation5 [shape = 'u8[16384]{0}', space=vmem, size = 0x4000, scoped, tag = 'input window, operand 1, single buffered']
    #allocation6 [shape = 's32[1]{0}', space=sflag, size = 0x4, scoped, tag = 'scoped memory for clip_attention_fwd.3']
    #allocation7 [shape = 'u8[512]{0}', space=vmem, size = 0x400, scoped, tag = 'input window, operand 2, single buffered']
    #allocation8 [shape = 'u8[8192]{0}', space=vmem, size = 0x2000, scoped, tag = 'output window, operand 0, single buffered']
    %8 = vsyncpa [#allocation3], 0
    %9 = vsyncpa [#allocation6], 0
    %10 = vsyncpa [#allocation4], 0
    // Predicated region
    $region2: #{clip_attention_fwd.3} parent=1 // pred_check
      _
    $region3: #{clip_attention_fwd.3} parent=1 // pred_check_branch
      %12 = sbr.rel (0) target = $region5
    $region4: #{clip_attention_fwd.3} parent=1 // pred_region
      %s14 = ssub.s32 256, 256
      %15 = vsyncadd [#allocation3], %s14
      %s16 = sshll.u32 [#allocation2], 4
      %s17 = int_to_ptr.vmem [resolvable:$true] %s16
      %22 = dma.hbm_to_vmem [thread:$0]  %s0, 256, %s17, [#allocation3], 128, 128, 8
    $region5: #{clip_attention_fwd.3} parent=1 // pred_fallthru
      _
    // Predicated region
    $region6: #{clip_attention_fwd.3} parent=1 // pred_check
      _
    $region7: #{clip_attention_fwd.3} parent=1 // pred_check_branch
      %24 = sbr.rel (0) target = $region9
    $region8: #{clip_attention_fwd.3} parent=1 // pred_region
      %s26 = ssub.s32 512, 512
      %27 = vsyncadd [#allocation6], %s26
      %s28 = sshll.u32 [#allocation5], 4
      %s29 = int_to_ptr.vmem [resolvable:$true] %s28
      %34 = dma.hbm_to_vmem [thread:$0]  %s1, 512, %s29, [#allocation6], 128, 128, 8
    $region9: #{clip_attention_fwd.3} parent=1 // pred_fallthru
      _
    // Predicated region
    $region10: #{clip_attention_fwd.3} parent=1 // pred_check
      _
    $region11: #{clip_attention_fwd.3} parent=1 // pred_check_branch
      %36 = sbr.rel (0) target = $region13
    $region12: #{clip_attention_fwd.3} parent=1 // pred_region
      %s38 = ssub.s32 16, 16
      %39 = vsyncadd [#allocation6], %s38
      %s41 = sshll.u32 [#allocation7], 4
      %s42 = int_to_ptr.vmem [resolvable:$true] %s41
      %44 = dma.hbm_to_vmem [thread:$0]  %s2, 16, %s42, [#allocation6]
    $region13: #{clip_attention_fwd.3} parent=1 // pred_fallthru
      _
    // Predicated region
    $region14: #{clip_attention_fwd.3} parent=1 // pred_check
      _
    $region15: #{clip_attention_fwd.3} parent=1 // pred_check_branch
      %46 = sbr.rel (0) target = $region17
    $region16: #{clip_attention_fwd.3} parent=1 // pred_region
      %47 = dma.done [#allocation3], 256
    $region17: #{clip_attention_fwd.3} parent=1 // pred_fallthru
      _
    // Predicated region
    $region18: #{clip_attention_fwd.3} parent=1 // pred_check
      _
    $region19: #{clip_attention_fwd.3} parent=1 // pred_check_branch
      %49 = sbr.rel (0) target = $region21
    $region20: #{clip_attention_fwd.3} parent=1 // pred_region
      %50 = dma.done [#allocation6], 512
    $region21: #{clip_attention_fwd.3} parent=1 // pred_fallthru
      _
    // Predicated region
    $region22: #{clip_attention_fwd.3} parent=1 // pred_check
      _
    $region23: #{clip_attention_fwd.3} parent=1 // pred_check_branch
      %52 = sbr.rel (0) target = $region25
    $region24: #{clip_attention_fwd.3} parent=1 // pred_region
      %53 = dma.done [#allocation6], 16
    $region25: #{clip_attention_fwd.3} parent=1 // pred_fallthru
      _
    %v54 = vld [vmem:[#allocation2] sm:$0xff]
    %v55 = vld [vmem:[#allocation2 + $0x8] sm:$0xff]
    %v56 = vld [vmem:[#allocation5] sm:$0xff]
    %v57 = vld [vmem:[#allocation5 + $0x8] sm:$0xff]
    %v58 = vld [vmem:[#allocation5 + $0x10] sm:$0xff]
    %v59 = vld [vmem:[#allocation5 + $0x18] sm:$0xff]
    %v60 = vld [vmem:[#allocation7] sm:$0x1]
    %v62 = vlaneseq
    %v63 = vshrl.u32 %v62, 7
    %v64 = vsub.s32 0, %v63
    %v65 = vrot.slane %v60, %v64
    %vm67 = vcmask 261120
    %v69 = vsel %vm67, %v54, 0
    %v72 = vsel %vm67, %v55, 0
    %74 = vmatprep.subr.mxu0 0.0
    %75 = vmatpush1.msra.mxu0 %v56
    %76 = vmatprep.subr.mxu0 0.0
    %77 = vmatpush1.msra.mxu0 %v57
    %78 = vmatprep.subr.mxu0 0.0
    %79 = vmatpush1.msra.mxu0 %v58
    %80 = vmatprep.subr.mxu0 0.0
    %81 = vmatpush1.msra.mxu0 %v59
    %82 = vmatprep.subr.mxu0 0.0
    %83 = vmatpush1.msra.mxu0 0.0
    %84 = vmatprep.subr.mxu0 0.0
    %85 = vmatpush1.msra.mxu0 0.0
    %86 = vmatprep.subr.mxu0 0.0
    %87 = vmatpush1.msra.mxu0 0.0
    %88 = vmatprep.subr.mxu0 0.0
    %89 = vmatpush1.msra.mxu0 0.0
    %90 = vmatprep.subr.mxu0 0.0
    %91 = vmatpush1.msra.mxu0 0.0
    %92 = vmatprep.subr.mxu0 0.0
    %93 = vmatpush1.msra.mxu0 0.0
    %94 = vmatprep.subr.mxu0 0.0
    %95 = vmatpush1.msra.mxu0 0.0
    %96 = vmatprep.subr.mxu0 0.0
    %97 = vmatpush1.msra.mxu0 0.0
    %98 = vmatprep.subr.mxu0 0.0
    %99 = vmatpush1.msra.mxu0 0.0
    %100 = vmatprep.subr.mxu0 0.0
    %101 = vmatpush1.msra.mxu0 0.0
    %102 = vmatprep.subr.mxu0 0.0
    %103 = vmatpush1.msra.mxu0 0.0
    %104 = vmatprep.subr.mxu0 0.0
    %105 = vmatpush1.msra.mxu0 0.0
    %106 = vmatprep.subr.mxu0 0.0
    %107 = vmatpush1.msra.mxu0 0.0
    %108 = vmatprep.subr.mxu0 0.0
    %109 = vmatpush1.msra.mxu0 0.0
    %110 = vmatprep.subr.mxu0 0.0
    %111 = vmatpush1.msra.mxu0 0.0
    %112 = vmatprep.subr.mxu0 0.0
    %113 = vmatpush1.msra.mxu0 0.0
    %114 = vmatprep.subr.mxu0 0.0
    %115 = vmatpush1.msra.mxu0 0.0
    %116 = vmatprep.subr.mxu0 0.0
    %117 = vmatpush1.msra.mxu0 0.0
    %118 = vmatprep.subr.mxu0 0.0
    %119 = vmatpush1.msra.mxu0 0.0
    %120 = vmatprep.subr.mxu0 0.0
    %121 = vmatpush1.msra.mxu0 0.0
    %122 = vmatprep.subr.mxu0 0.0
    %123 = vmatpush1.msra.mxu0 0.0
    %124 = vmatprep.subr.mxu0 0.0
    %125 = vmatpush1.msra.mxu0 0.0
    %126 = vmatprep.subr.mxu0 0.0
    %127 = vmatpush1.msra.mxu0 0.0
    %128 = vmatprep.subr.mxu0 0.0
    %129 = vmatpush1.msra.mxu0 0.0
    %130 = vmatprep.subr.mxu0 0.0
    %131 = vmatpush1.msra.mxu0 0.0
    %132 = vmatprep.subr.mxu0 0.0
    %133 = vmatpush1.msra.mxu0 0.0
    %134 = vmatprep.subr.mxu0 0.0
    %135 = vmatpush1.msra.mxu0 0.0
    %136 = vmatprep.subr.mxu0 0.0
    %137 = vmatpush1.msra.mxu0 0.0
    %138 = vmatprep.mubr.f32.mxu0 0.0
    %139 = vmatmul.mubr.f32.gmra.mrb[0].mxu0 %v69
    %v140 = vpop.f32.mrb[0].mxu0
    %v141 = vadd.f32 %v65, %v140
    %v142 = vpop.f32.mrb[0].mxu0
    %143 = vmatprep.mubr.f32.mxu0 0.0
    %144 = vmatmul.mubr.f32.gmra.mrb[0].mxu0 %v72
    %v145 = vpop.f32.mrb[0].mxu0
    %v146 = vadd.f32 %v65, %v145
    %v147 = vpop.f32.mrb[0].mxu0
    %148 = vdwg.mxu0
    %vm149 = vcmask 785408
    %150 = vst.msk [vmem:[#allocation8] sm:$0xff] %vm149, %v141
    %151 = vst.msk [vmem:[#allocation8 + $0x8] sm:$0xff] %vm149, %v146
    // Predicated region
    $region26: #{clip_attention_fwd.3} parent=1 // pred_check
      _
    $region27: #{clip_attention_fwd.3} parent=1 // pred_check_branch
      %153 = sbr.rel (0) target = $region29
    $region28: #{clip_attention_fwd.3} parent=1 // pred_region
      %s155 = ssub.s32 256, 256
      %156 = vsyncadd [#allocation4], %s155
      %s157 = sshll.u32 [#allocation8], 4
      %s158 = int_to_ptr.vmem [resolvable:$true] %s157
      %163 = dma.vmem_to_hbm [thread:$0]  %s158, 256, %s3, [#allocation4], 128, 128, 8
    $region29: #{clip_attention_fwd.3} parent=1 // pred_fallthru
      _
    // Predicated region
    $region30: #{clip_attention_fwd.3} parent=1 // pred_check
      _
    $region31: #{clip_attention_fwd.3} parent=1 // pred_check_branch
      %165 = sbr.rel (0) target = $region33
    $region32: #{clip_attention_fwd.3} parent=1 // pred_region
      %166 = dma.done [#allocation4], 256
    $region33: #{clip_attention_fwd.3} parent=1 // pred_fallthru
      _
    %167 = vsyncpa [#allocation3], 1
    %168 = vsyncpa [#allocation6], 1
    %169 = vsyncpa [#allocation4], 1

// kernel: clip_attention_fwd.4
$region0: #{clip_attention_fwd.4}
  #allocation0 [shape = 'u32[]', space=smem, size = 0x4, offset = 0x4, fixed_abs, tag = 'smem constant byte address 0x4 - core index']
  #allocation1 [shape = 'u32[144,128]{1,0:T(1,128)}', space=vmem, size = 0x12000, scoped, tag = 'internal scratch']
  %s0 = inlined_call_operand.hbm [shape: f32[2,8,96], index: 0, kind: input, shape index: {}, may-alias: {0,1,2}]
  %s1 = inlined_call_operand.hbm [shape: f32[2,8,96], index: 1, kind: input, shape index: {}, may-alias: {0,1,2}]
  %s2 = inlined_call_operand.hbm [shape: f32[2,8,96], index: 2, kind: input, shape index: {}, may-alias: {0,1,2}]
  %s3 = inlined_call_operand.hbm [shape: f32[2,8,32], index: 3, kind: output, shape index: {}]
  %s4 = sld [smem:[#allocation0]]
  $region57: #{clip_attention_fwd.4} parent=0
    _
  %s6 = ssub.s32 1, %s4
  %s7 = scalar_select 0, %s6, %s4
  $region1: #{clip_attention_fwd.4} parent=0
    #allocation2 [shape = 'u8[8192]{0}', space=vmem, size = 0x2000, scoped, tag = 'input window, operand 0']
    #allocation3 [shape = 's32[2]{0}', space=sflag, size = 0x8, scoped, tag = 'scoped memory for clip_attention_fwd.4']
    #allocation4 [shape = 's32[2]{0}', space=sflag, size = 0x8, scoped, tag = 'scoped memory for clip_attention_fwd.4']
    #allocation5 [shape = 'u8[8192]{0}', space=vmem, size = 0x2000, scoped, tag = 'input window, operand 1']
    #allocation6 [shape = 's32[2]{0}', space=sflag, size = 0x8, scoped, tag = 'scoped memory for clip_attention_fwd.4']
    #allocation7 [shape = 'u8[8192]{0}', space=vmem, size = 0x2000, scoped, tag = 'input window, operand 2']
    #allocation8 [shape = 'u8[8192]{0}', space=vmem, size = 0x2000, scoped, tag = 'output window, operand 0']
    %8 = vsyncpa [#allocation3], 0
    %s9 = scalar_lea.sflag [#allocation3], 1
    %10 = vsyncpa %s9, 0
    %11 = vsyncpa [#allocation6], 0
    %s12 = scalar_lea.sflag [#allocation6], 1
    %13 = vsyncpa %s12, 0
    %14 = vsyncpa [#allocation4], 0
    %s15 = scalar_lea.sflag [#allocation4], 1
    %16 = vsyncpa %s15, 0
    loop: start=0, step=1, limit=4
    $region2: #{clip_attention_fwd.4} parent=1 // loop_pre_header
      _
    $region3: #{clip_attention_fwd.4} parent=1 // loop_header
      %s18 = sphi 0, %s22
      %p19 = scmp.ge.s32.totalorder %s18, 4
      %s25 = sphi 0, %s44
      %s26 = sphi 0, %s40
      %s27 = sphi 0, %s36
      %s28 = sphi 0, %s25
      %s29 = sphi 0, %s26
      %s30 = sphi 0, %s27
      %s31 = sphi 0, %s28
      %s32 = sphi 0, %s29
      %s33 = sphi 0, %s30
      %s49 = sphi 0, %s51
      %s52 = sphi 0, %s49
      %s53 = sphi 0, %s52
      %s69 = sphi 0, %s53
      %s75 = sphi 0, %s77
      %s78 = sphi 0, %s75
      %s79 = sphi 0, %s78
      %s95 = sphi 0, %s79
      %s101 = sphi 0, %s103
      %s104 = sphi 0, %s101
      %s105 = sphi 0, %s104
      %s121 = sphi 0, %s105
      %s129 = sphi 0, %s131
      %s132 = sphi 0, %s129
      %s133 = sphi 0, %s132
      %s149 = sphi 0, %s133
    $region4: #{clip_attention_fwd.4} parent=1 // loop_header_branch
      %21 = sbr.rel (%p19) target = $region8
    $region5: #{clip_attention_fwd.4} parent=1 // loop_body
      %s23 = ssub.s32 %s18, 1
      %s24 = ssub.s32 %s18, 2
      %s34 = sadd.s32 1, %s27
      %p35 = scmp.ge.s32.totalorder %s34, 1
      %s36 = scalar_select %p35, 0, %s34
      %s37 = sadd.s32 1, %s26
      %s38 = scalar_select %p35, %s37, %s26
      %p39 = scmp.ge.s32.totalorder %s38, 1
      %s40 = scalar_select %p39, 0, %s38
      %s41 = sadd.s32 1, %s25
      %s42 = scalar_select %p39, %s41, %s25
      %p43 = scmp.ge.s32.totalorder %s42, 2
      %s44 = scalar_select %p43, 0, %s42
      %s45 = ssub.s32 %s25, %s44
      %s46 = ssub.s32 %s27, %s36
      %s47 = sor.u32 %s45, %s46
      %p48 = scmp.eq.s32.totalorder %s47, 0
      %s50 = sadd.s32 %s49, 1
      %s51 = scalar_select %p48, %s49, %s50
      %p54 = pneg %p48
      %p55 = scmp.eq.s32.totalorder %s18, 1
      %p56 = por %p54, %p55
      %p57 = scmp.ne.s32.totalorder %s49, %s52
      %p58 = scmp.eq.s32.totalorder %s18, 0
      %p59 = por %p57, %p58
      %p60 = scmp.ne.s32.totalorder %s49, %s52
      %p61 = scmp.eq.s32.totalorder %s23, 1
      %p62 = por %p60, %p61
      %p63 = scmp.ne.s32.totalorder %s52, %s53
      %p64 = scmp.eq.s32.totalorder %s23, 0
      %p65 = por %p63, %p64
      %p66 = scmp.ne.s32.totalorder %s52, %s53
      %p67 = scmp.eq.s32.totalorder %s24, 1
      %p68 = por %p66, %p67
      %p70 = scmp.ne.s32.totalorder %s53, %s69
      %p71 = scmp.eq.s32.totalorder %s24, 0
      %p72 = por %p70, %p71
      %s73 = ssub.s32 %s25, %s44
      %p74 = scmp.eq.s32.totalorder %s73, 0
      %s76 = sadd.s32 %s75, 1
      %s77 = scalar_select %p74, %s75, %s76
      %p80 = pneg %p74
      %p81 = scmp.eq.s32.totalorder %s18, 1
      %p82 = por %p80, %p81
      %p83 = scmp.ne.s32.totalorder %s75, %s78
      %p84 = scmp.eq.s32.totalorder %s18, 0
      %p85 = por %p83, %p84
      %p86 = scmp.ne.s32.totalorder %s75, %s78
      %p87 = scmp.eq.s32.totalorder %s23, 1
      %p88 = por %p86, %p87
      %p89 = scmp.ne.s32.totalorder %s78, %s79
      %p90 = scmp.eq.s32.totalorder %s23, 0
      %p91 = por %p89, %p90
      %p92 = scmp.ne.s32.totalorder %s78, %s79
      %p93 = scmp.eq.s32.totalorder %s24, 1
      %p94 = por %p92, %p93
      %p96 = scmp.ne.s32.totalorder %s79, %s95
      %p97 = scmp.eq.s32.totalorder %s24, 0
      %p98 = por %p96, %p97
      %s99 = ssub.s32 %s25, %s44
      %p100 = scmp.eq.s32.totalorder %s99, 0
      %s102 = sadd.s32 %s101, 1
      %s103 = scalar_select %p100, %s101, %s102
      %p106 = pneg %p100
      %p107 = scmp.eq.s32.totalorder %s18, 1
      %p108 = por %p106, %p107
      %p109 = scmp.ne.s32.totalorder %s101, %s104
      %p110 = scmp.eq.s32.totalorder %s18, 0
      %p111 = por %p109, %p110
      %p112 = scmp.ne.s32.totalorder %s101, %s104
      %p113 = scmp.eq.s32.totalorder %s23, 1
      %p114 = por %p112, %p113
      %p115 = scmp.ne.s32.totalorder %s104, %s105
      %p116 = scmp.eq.s32.totalorder %s23, 0
      %p117 = por %p115, %p116
      %p118 = scmp.ne.s32.totalorder %s104, %s105
      %p119 = scmp.eq.s32.totalorder %s24, 1
      %p120 = por %p118, %p119
      %p122 = scmp.ne.s32.totalorder %s105, %s121
      %p123 = scmp.eq.s32.totalorder %s24, 0
      %p124 = por %p122, %p123
      %s125 = ssub.s32 %s25, %s44
      %s126 = ssub.s32 %s27, %s36
      %s127 = sor.u32 %s125, %s126
      %p128 = scmp.eq.s32.totalorder %s127, 0
      %s130 = sadd.s32 %s129, 1
      %s131 = scalar_select %p128, %s129, %s130
      %p134 = pneg %p128
      %p135 = scmp.eq.s32.totalorder %s18, 1
      %p136 = por %p134, %p135
      %p137 = scmp.ne.s32.totalorder %s129, %s132
      %p138 = scmp.eq.s32.totalorder %s18, 0
      %p139 = por %p137, %p138
      %p140 = scmp.ne.s32.totalorder %s129, %s132
      %p141 = scmp.eq.s32.totalorder %s23, 1
      %p142 = por %p140, %p141
      %p143 = scmp.ne.s32.totalorder %s132, %s133
      %p144 = scmp.eq.s32.totalorder %s23, 0
      %p145 = por %p143, %p144
      %p146 = scmp.ne.s32.totalorder %s132, %s133
      %p147 = scmp.eq.s32.totalorder %s24, 1
      %p148 = por %p146, %p147
      %p150 = scmp.ne.s32.totalorder %s133, %s149
      %p151 = scmp.eq.s32.totalorder %s24, 0
      %p152 = por %p150, %p151
      %p153 = scmp.le.s32.totalorder 1, %s18
      %p154 = scmp.lt.s32.totalorder %s18, 3
      %p155 = pnand %p153, %p154
      %p156 = pneg %p155
      // Predicated region
      $region9: #{clip_attention_fwd.4} parent=5 // pred_check
        _
      $region10: #{clip_attention_fwd.4} parent=5 // pred_check_branch
        %158 = sbr.rel (%p155) target = $region12
      $region11: #{clip_attention_fwd.4} parent=5 // pred_region
        %s159 = ssub.s32 %s18, 1
      $region12: #{clip_attention_fwd.4} parent=5 // pred_fallthru
        _
      %p160 = scmp.lt.s32.totalorder %s18, 2
      // Predicated region
      $region13: #{clip_attention_fwd.4} parent=5 // pred_check
        %p161 = pneg %p160
      $region14: #{clip_attention_fwd.4} parent=5 // pred_check_branch
        %163 = sbr.rel (%p161) target = $region16
      $region15: #{clip_attention_fwd.4} parent=5 // pred_region
        // Predicated region
        $region17: #{clip_attention_fwd.4} parent=15 // pred_check
          %p164 = pneg %p59
        $region18: #{clip_attention_fwd.4} parent=15 // pred_check_branch
          %166 = sbr.rel (%p164) target = $region20
        $region19: #{clip_attention_fwd.4} parent=15 // pred_region
          %s167 = sand.u32 %s49, 1
          %s168 = scalar_lea.sflag [#allocation3], %s167
          %s169 = sand.u32 %s49, 1
          %s170 = smul.addr %s169, 8
          %s171 = scalar_lea.vmem [#allocation2], %s170
          %s173 = ssub.s32 128, 128
          %174 = vsyncadd %s168, %s173
          %s175 = sadd.s32 %s27, %s25
          %s176 = smul.addr %s175, 128
          %s177 = scalar_lea.hbm %s0, %s176
          %s179 = sshll.u32 %s171, 4
          %s180 = int_to_ptr.vmem [resolvable:$true] %s179
          %182 = dma.hbm_to_vmem [thread:$0]  %s177, 128, %s180, %s168
        $region20: #{clip_attention_fwd.4} parent=15 // pred_fallthru
          _
        // Predicated region
        $region21: #{clip_attention_fwd.4} parent=15 // pred_check
          %p183 = pneg %p85
        $region22: #{clip_attention_fwd.4} parent=15 // pred_check_branch
          %185 = sbr.rel (%p183) target = $region24
        $region23: #{clip_attention_fwd.4} parent=15 // pred_region
          %s186 = sand.u32 %s18, 1
          %s187 = scalar_lea.sflag [#allocation6], %s186
          %s188 = sand.u32 %s75, 1
          %s189 = smul.addr %s188, 8
          %s190 = scalar_lea.vmem [#allocation5], %s189
          %s192 = ssub.s32 128, 128
          %193 = vsyncadd %s187, %s192
          %s194 = smul.addr %s25, 128
          %s195 = scalar_lea.hbm %s1, %s194
          %s197 = sshll.u32 %s190, 4
          %s198 = int_to_ptr.vmem [resolvable:$true] %s197
          %200 = dma.hbm_to_vmem [thread:$0]  %s195, 128, %s198, %s187
        $region24: #{clip_attention_fwd.4} parent=15 // pred_fallthru
          _
        // Predicated region
        $region25: #{clip_attention_fwd.4} parent=15 // pred_check
          %p201 = pneg %p111
        $region26: #{clip_attention_fwd.4} parent=15 // pred_check_branch
          %203 = sbr.rel (%p201) target = $region28
        $region27: #{clip_attention_fwd.4} parent=15 // pred_region
          %s204 = sand.u32 %s18, 1
          %s205 = scalar_lea.sflag [#allocation6], %s204
          %s206 = sand.u32 %s101, 1
          %s207 = smul.addr %s206, 8
          %s208 = scalar_lea.vmem [#allocation7], %s207
          %s210 = ssub.s32 128, 128
          %211 = vsyncadd %s205, %s210
          %s212 = smul.addr %s25, 128
          %s213 = scalar_lea.hbm %s2, %s212
          %s215 = sshll.u32 %s208, 4
          %s216 = int_to_ptr.vmem [resolvable:$true] %s215
          %218 = dma.hbm_to_vmem [thread:$0]  %s213, 128, %s216, %s205
        $region28: #{clip_attention_fwd.4} parent=15 // pred_fallthru
          _
      $region16: #{clip_attention_fwd.4} parent=5 // pred_fallthru
        _
      %p219 = scmp.le.s32.totalorder 1, %s18
      %p220 = scmp.lt.s32.totalorder %s18, 3
      %p221 = pnand %p219, %p220
      %p222 = pneg %p221
      // Predicated region
      $region29: #{clip_attention_fwd.4} parent=5 // pred_check
        _
      $region30: #{clip_attention_fwd.4} parent=5 // pred_check_branch
        %224 = sbr.rel (%p221) target = $region32
      $region31: #{clip_attention_fwd.4} parent=5 // pred_region
        %s225 = ssub.s32 %s18, 1
        %s226 = sand.u32 %s52, 1
        %s227 = scalar_lea.sflag [#allocation3], %s226
        %s228 = sand.u32 %s52, 1
        %s229 = smul.addr %s228, 8
        %s230 = scalar_lea.vmem [#allocation2], %s229
        // Predicated region
        $region33: #{clip_attention_fwd.4} parent=31 // pred_check
          %p231 = pneg %p65
        $region34: #{clip_attention_fwd.4} parent=31 // pred_check_branch
          %233 = sbr.rel (%p231) target = $region36
        $region35: #{clip_attention_fwd.4} parent=31 // pred_region
          %234 = dma.done %s227, 128
        $region36: #{clip_attention_fwd.4} parent=31 // pred_fallthru
          _
        %s235 = sand.u32 %s23, 1
        %s236 = scalar_lea.sflag [#allocation6], %s235
        %s237 = sand.u32 %s78, 1
        %s238 = smul.addr %s237, 8
        %s239 = scalar_lea.vmem [#allocation5], %s238
        // Predicated region
        $region37: #{clip_attention_fwd.4} parent=31 // pred_check
          %p240 = pneg %p91
        $region38: #{clip_attention_fwd.4} parent=31 // pred_check_branch
          %242 = sbr.rel (%p240) target = $region40
        $region39: #{clip_attention_fwd.4} parent=31 // pred_region
          %243 = dma.done %s236, 128
        $region40: #{clip_attention_fwd.4} parent=31 // pred_fallthru
          _
        %s244 = sand.u32 %s23, 1
        %s245 = scalar_lea.sflag [#allocation6], %s244
        %s246 = sand.u32 %s104, 1
        %s247 = smul.addr %s246, 8
        %s248 = scalar_lea.vmem [#allocation7], %s247
        // Predicated region
        $region41: #{clip_attention_fwd.4} parent=31 // pred_check
          %p249 = pneg %p117
        $region42: #{clip_attention_fwd.4} parent=31 // pred_check_branch
          %251 = sbr.rel (%p249) target = $region44
        $region43: #{clip_attention_fwd.4} parent=31 // pred_region
          %252 = dma.done %s245, 128
        $region44: #{clip_attention_fwd.4} parent=31 // pred_fallthru
          _
        %s253 = sand.u32 %s52, 1
        %s254 = scalar_lea.sflag [#allocation3], %s253
        %s255 = sand.u32 %s52, 1
        %s256 = smul.addr %s255, 8
        %s257 = scalar_lea.vmem [#allocation2], %s256
        %p258 = pneg %p65
        %p259 = pneg %p62
        %s260 = sand.u32 %s23, 1
        %s261 = scalar_lea.sflag [#allocation6], %s260
        %s262 = sand.u32 %s78, 1
        %s263 = smul.addr %s262, 8
        %s264 = scalar_lea.vmem [#allocation5], %s263
        %p265 = pneg %p91
        %p266 = pneg %p88
        %s267 = sand.u32 %s23, 1
        %s268 = scalar_lea.sflag [#allocation6], %s267
        %s269 = sand.u32 %s104, 1
        %s270 = smul.addr %s269, 8
        %s271 = scalar_lea.vmem [#allocation7], %s270
        %p272 = pneg %p117
        %p273 = pneg %p114
        %p274 = pneg %p145
        %p275 = pneg %p142
        %s276 = sand.u32 %s132, 1
        %s277 = scalar_lea.sflag [#allocation4], %s276
        %s278 = sand.u32 %s132, 1
        %s279 = smul.addr %s278, 8
        %s280 = scalar_lea.vmem [#allocation8], %s279
        %v281 = vld [vmem:[%s230] sm:$0xff]
        %v282 = vld [vmem:[%s239] sm:$0xff]
        %v283 = vld [vmem:[%s248] sm:$0xff]
        %v284 = vmul.f32 %v281, 0.35355338
        %286 = vrot.lane.b32.xlu0 %v282, 96
        %v287 = vpop.permute.xlu0 %286
        %vm288 = vcmask 64512
        %v290 = vsel %vm288, %v284, 0
        %v292 = vsel %vm288, %v287, 0
        %294 = vmatprep.subr.mxu0 0.0
        %295 = vmatpush1.xpose.msra.mxu0 %v292
        %296 = vmatprep.subr.mxu0 0.0
        %297 = vmatpush1.xpose.msra.mxu0 0.0
        %298 = vmatprep.subr.mxu0 0.0
        %299 = vmatpush1.xpose.msra.mxu0 0.0
        %300 = vmatprep.subr.mxu0 0.0
        %301 = vmatpush1.xpose.msra.mxu0 0.0
        %302 = vmatprep.subr.mxu0 0.0
        %303 = vmatpush1.xpose.msra.mxu0 0.0
        %304 = vmatprep.subr.mxu0 0.0
        %305 = vmatpush1.xpose.msra.mxu0 0.0
        %306 = vmatprep.subr.mxu0 0.0
        %307 = vmatpush1.xpose.msra.mxu0 0.0
        %308 = vmatprep.subr.mxu0 0.0
        %309 = vmatpush1.xpose.msra.mxu0 0.0
        %310 = vmatprep.subr.mxu0 0.0
        %311 = vmatpush1.xpose.msra.mxu0 0.0
        %312 = vmatprep.subr.mxu0 0.0
        %313 = vmatpush1.xpose.msra.mxu0 0.0
        %314 = vmatprep.subr.mxu0 0.0
        %315 = vmatpush1.xpose.msra.mxu0 0.0
        %316 = vmatprep.subr.mxu0 0.0
        %317 = vmatpush1.xpose.msra.mxu0 0.0
        %318 = vmatprep.subr.mxu0 0.0
        %319 = vmatpush1.xpose.msra.mxu0 0.0
        %320 = vmatprep.subr.mxu0 0.0
        %321 = vmatpush1.xpose.msra.mxu0 0.0
        %322 = vmatprep.subr.mxu0 0.0
        %323 = vmatpush1.xpose.msra.mxu0 0.0
        %324 = vmatprep.subr.mxu0 0.0
        %325 = vmatpush1.xpose.msra.mxu0 0.0
        %326 = vmatprep.subr.mxu0 0.0
        %327 = vmatpush1.xpose.msra.mxu0 0.0
        %328 = vmatprep.subr.mxu0 0.0
        %329 = vmatpush1.xpose.msra.mxu0 0.0
        %330 = vmatprep.subr.mxu0 0.0
        %331 = vmatpush1.xpose.msra.mxu0 0.0
        %332 = vmatprep.subr.mxu0 0.0
        %333 = vmatpush1.xpose.msra.mxu0 0.0
        %334 = vmatprep.subr.mxu0 0.0
        %335 = vmatpush1.xpose.msra.mxu0 0.0
        %336 = vmatprep.subr.mxu0 0.0
        %337 = vmatpush1.xpose.msra.mxu0 0.0
        %338 = vmatprep.subr.mxu0 0.0
        %339 = vmatpush1.xpose.msra.mxu0 0.0
        %340 = vmatprep.subr.mxu0 0.0
        %341 = vmatpush1.xpose.msra.mxu0 0.0
        %342 = vmatprep.subr.mxu0 0.0
        %343 = vmatpush1.xpose.msra.mxu0 0.0
        %344 = vmatprep.subr.mxu0 0.0
        %345 = vmatpush1.xpose.msra.mxu0 0.0
        %346 = vmatprep.subr.mxu0 0.0
        %347 = vmatpush1.xpose.msra.mxu0 0.0
        %348 = vmatprep.subr.mxu0 0.0
        %349 = vmatpush1.xpose.msra.mxu0 0.0
        %350 = vmatprep.subr.mxu0 0.0
        %351 = vmatpush1.xpose.msra.mxu0 0.0
        %352 = vmatprep.subr.mxu0 0.0
        %353 = vmatpush1.xpose.msra.mxu0 0.0
        %354 = vmatprep.subr.mxu0 0.0
        %355 = vmatpush1.xpose.msra.mxu0 0.0
        %356 = vmatprep.subr.mxu0 0.0
        %357 = vmatpush1.xpose.msra.mxu0 0.0
        %358 = vmatprep.mubr.f32.mxu0 0.0
        %359 = vmatmul.mubr.f32.gmra.mrb[0].mxu0 %v290
        %v360 = vpop.f32.mrb[0].mxu0
        %v361 = vadd.f32 0.0, %v360
        %v362 = vpop.f32.mrb[0].mxu0
        %363 = vdwg.mxu0
        %v364 = vsel %vm288, %v361, -inf
        %365 = vmax.xlane.f32.xlu0 %v364
        %v366 = vpop.xlane.xlu0 %365
        %v367 = vsub.f32 %v361, %v366
        %v368 = vmul.f32 %v367, 1.442695
        %v369 = vpow.pop %v368
        %v370 = vsel %vm288, %v369, 0.0
        %371 = vadd.xlane.f32.xlu0 %v370
        %v372 = vpop.xlane.xlu0 %371
        %374 = vrot.lane.b32.xlu0 %v283, 64
        %v375 = vpop.permute.xlu0 %374
        %v378 = vsel %vm288, %v369, 0
        %380 = vmatprep.subr.mxu0 0.0
        %381 = vmatpush1.msra.mxu0 %v375
        %382 = vmatprep.subr.mxu0 0.0
        %383 = vmatpush1.msra.mxu0 0.0
        %384 = vmatprep.subr.mxu0 0.0
        %385 = vmatpush1.msra.mxu0 0.0
        %386 = vmatprep.subr.mxu0 0.0
        %387 = vmatpush1.msra.mxu0 0.0
        %388 = vmatprep.subr.mxu0 0.0
        %389 = vmatpush1.msra.mxu0 0.0
        %390 = vmatprep.subr.mxu0 0.0
        %391 = vmatpush1.msra.mxu0 0.0
        %392 = vmatprep.subr.mxu0 0.0
        %393 = vmatpush1.msra.mxu0 0.0
        %394 = vmatprep.subr.mxu0 0.0
        %395 = vmatpush1.msra.mxu0 0.0
        %396 = vmatprep.subr.mxu0 0.0
        %397 = vmatpush1.msra.mxu0 0.0
        %398 = vmatprep.subr.mxu0 0.0
        %399 = vmatpush1.msra.mxu0 0.0
        %400 = vmatprep.subr.mxu0 0.0
        %401 = vmatpush1.msra.mxu0 0.0
        %402 = vmatprep.subr.mxu0 0.0
        %403 = vmatpush1.msra.mxu0 0.0
        %404 = vmatprep.subr.mxu0 0.0
        %405 = vmatpush1.msra.mxu0 0.0
        %406 = vmatprep.subr.mxu0 0.0
        %407 = vmatpush1.msra.mxu0 0.0
        %408 = vmatprep.subr.mxu0 0.0
        %409 = vmatpush1.msra.mxu0 0.0
        %410 = vmatprep.subr.mxu0 0.0
        %411 = vmatpush1.msra.mxu0 0.0
        %412 = vmatprep.subr.mxu0 0.0
        %413 = vmatpush1.msra.mxu0 0.0
        %414 = vmatprep.subr.mxu0 0.0
        %415 = vmatpush1.msra.mxu0 0.0
        %416 = vmatprep.subr.mxu0 0.0
        %417 = vmatpush1.msra.mxu0 0.0
        %418 = vmatprep.subr.mxu0 0.0
        %419 = vmatpush1.msra.mxu0 0.0
        %420 = vmatprep.subr.mxu0 0.0
        %421 = vmatpush1.msra.mxu0 0.0
        %422 = vmatprep.subr.mxu0 0.0
        %423 = vmatpush1.msra.mxu0 0.0
        %424 = vmatprep.subr.mxu0 0.0
        %425 = vmatpush1.msra.mxu0 0.0
        %426 = vmatprep.subr.mxu0 0.0
        %427 = vmatpush1.msra.mxu0 0.0
        %428 = vmatprep.subr.mxu0 0.0
        %429 = vmatpush1.msra.mxu0 0.0
        %430 = vmatprep.subr.mxu0 0.0
        %431 = vmatpush1.msra.mxu0 0.0
        %432 = vmatprep.subr.mxu0 0.0
        %433 = vmatpush1.msra.mxu0 0.0
        %434 = vmatprep.subr.mxu0 0.0
        %435 = vmatpush1.msra.mxu0 0.0
        %436 = vmatprep.subr.mxu0 0.0
        %437 = vmatpush1.msra.mxu0 0.0
        %438 = vmatprep.subr.mxu0 0.0
        %439 = vmatpush1.msra.mxu0 0.0
        %440 = vmatprep.subr.mxu0 0.0
        %441 = vmatpush1.msra.mxu0 0.0
        %442 = vmatprep.subr.mxu0 0.0
        %443 = vmatpush1.msra.mxu0 0.0
        %444 = vmatprep.mubr.f32.mxu0 0.0
        %445 = vmatmul.mubr.f32.gmra.mrb[0].mxu0 %v378
        %v446 = vpop.f32.mrb[0].mxu0
        %v447 = vadd.f32 0.0, %v446
        %v448 = vpop.f32.mrb[0].mxu0
        %449 = vdwg.mxu0
        %v450 = vrcp.pop %v372
        %v451 = vmul.f32 %v447, %v450
        %452 = vrot.lane.b32.xlu0 %v284, 120
        %v453 = vpop.permute.xlu0 %452
        %454 = vrot.lane.b32.xlu0 %v282, 88
        %v455 = vpop.permute.xlu0 %454
        %v456 = vsel %vm288, %v453, 0
        %v458 = vsel %vm288, %v455, 0
        %460 = vmatprep.subr.mxu0 0.0
        %461 = vmatpush1.xpose.msra.mxu0 %v458
        %462 = vmatprep.subr.mxu0 0.0
        %463 = vmatpush1.xpose.msra.mxu0 0.0
        %464 = vmatprep.subr.mxu0 0.0
        %465 = vmatpush1.xpose.msra.mxu0 0.0
        %466 = vmatprep.subr.mxu0 0.0
        %467 = vmatpush1.xpose.msra.mxu0 0.0
        %468 = vmatprep.subr.mxu0 0.0
        %469 = vmatpush1.xpose.msra.mxu0 0.0
        %470 = vmatprep.subr.mxu0 0.0
        %471 = vmatpush1.xpose.msra.mxu0 0.0
        %472 = vmatprep.subr.mxu0 0.0
        %473 = vmatpush1.xpose.msra.mxu0 0.0
        %474 = vmatprep.subr.mxu0 0.0
        %475 = vmatpush1.xpose.msra.mxu0 0.0
        %476 = vmatprep.subr.mxu0 0.0
        %477 = vmatpush1.xpose.msra.mxu0 0.0
        %478 = vmatprep.subr.mxu0 0.0
        %479 = vmatpush1.xpose.msra.mxu0 0.0
        %480 = vmatprep.subr.mxu0 0.0
        %481 = vmatpush1.xpose.msra.mxu0 0.0
        %482 = vmatprep.subr.mxu0 0.0
        %483 = vmatpush1.xpose.msra.mxu0 0.0
        %484 = vmatprep.subr.mxu0 0.0
        %485 = vmatpush1.xpose.msra.mxu0 0.0
        %486 = vmatprep.subr.mxu0 0.0
        %487 = vmatpush1.xpose.msra.mxu0 0.0
        %488 = vmatprep.subr.mxu0 0.0
        %489 = vmatpush1.xpose.msra.mxu0 0.0
        %490 = vmatprep.subr.mxu0 0.0
        %491 = vmatpush1.xpose.msra.mxu0 0.0
        %492 = vmatprep.subr.mxu0 0.0
        %493 = vmatpush1.xpose.msra.mxu0 0.0
        %494 = vmatprep.subr.mxu0 0.0
        %495 = vmatpush1.xpose.msra.mxu0 0.0
        %496 = vmatprep.subr.mxu0 0.0
        %497 = vmatpush1.xpose.msra.mxu0 0.0
        %498 = vmatprep.subr.mxu0 0.0
        %499 = vmatpush1.xpose.msra.mxu0 0.0
        %500 = vmatprep.subr.mxu0 0.0
        %501 = vmatpush1.xpose.msra.mxu0 0.0
        %502 = vmatprep.subr.mxu0 0.0
        %503 = vmatpush1.xpose.msra.mxu0 0.0
        %504 = vmatprep.subr.mxu0 0.0
        %505 = vmatpush1.xpose.msra.mxu0 0.0
        %506 = vmatprep.subr.mxu0 0.0
        %507 = vmatpush1.xpose.msra.mxu0 0.0
        %508 = vmatprep.subr.mxu0 0.0
        %509 = vmatpush1.xpose.msra.mxu0 0.0
        %510 = vmatprep.subr.mxu0 0.0
        %511 = vmatpush1.xpose.msra.mxu0 0.0
        %512 = vmatprep.subr.mxu0 0.0
        %513 = vmatpush1.xpose.msra.mxu0 0.0
        %514 = vmatprep.subr.mxu0 0.0
        %515 = vmatpush1.xpose.msra.mxu0 0.0
        %516 = vmatprep.subr.mxu0 0.0
        %517 = vmatpush1.xpose.msra.mxu0 0.0
        %518 = vmatprep.subr.mxu0 0.0
        %519 = vmatpush1.xpose.msra.mxu0 0.0
        %520 = vmatprep.subr.mxu0 0.0
        %521 = vmatpush1.xpose.msra.mxu0 0.0
        %522 = vmatprep.subr.mxu0 0.0
        %523 = vmatpush1.xpose.msra.mxu0 0.0
        %524 = vmatprep.mubr.f32.mxu0 0.0
        %525 = vmatmul.mubr.f32.gmra.mrb[0].mxu0 %v456
        %v526 = vpop.f32.mrb[0].mxu0
        %v527 = vadd.f32 0.0, %v526
        %v528 = vpop.f32.mrb[0].mxu0
        %529 = vdwg.mxu0
        %v530 = vsel %vm288, %v527, -inf
        %531 = vmax.xlane.f32.xlu0 %v530
        %v532 = vpop.xlane.xlu0 %531
        %v533 = vsub.f32 %v527, %v532
        %v534 = vmul.f32 %v533, 1.442695
        %v535 = vpow.pop %v534
        %v536 = vsel %vm288, %v535, 0.0
        %537 = vadd.xlane.f32.xlu0 %v536
        %v538 = vpop.xlane.xlu0 %537
        %539 = vrot.lane.b32.xlu0 %v283, 56
        %v540 = vpop.permute.xlu0 %539
        %v543 = vsel %vm288, %v535, 0
        %545 = vmatprep.subr.mxu0 0.0
        %546 = vmatpush1.msra.mxu0 %v540
        %547 = vmatprep.subr.mxu0 0.0
        %548 = vmatpush1.msra.mxu0 0.0
        %549 = vmatprep.subr.mxu0 0.0
        %550 = vmatpush1.msra.mxu0 0.0
        %551 = vmatprep.subr.mxu0 0.0
        %552 = vmatpush1.msra.mxu0 0.0
        %553 = vmatprep.subr.mxu0 0.0
        %554 = vmatpush1.msra.mxu0 0.0
        %555 = vmatprep.subr.mxu0 0.0
        %556 = vmatpush1.msra.mxu0 0.0
        %557 = vmatprep.subr.mxu0 0.0
        %558 = vmatpush1.msra.mxu0 0.0
        %559 = vmatprep.subr.mxu0 0.0
        %560 = vmatpush1.msra.mxu0 0.0
        %561 = vmatprep.subr.mxu0 0.0
        %562 = vmatpush1.msra.mxu0 0.0
        %563 = vmatprep.subr.mxu0 0.0
        %564 = vmatpush1.msra.mxu0 0.0
        %565 = vmatprep.subr.mxu0 0.0
        %566 = vmatpush1.msra.mxu0 0.0
        %567 = vmatprep.subr.mxu0 0.0
        %568 = vmatpush1.msra.mxu0 0.0
        %569 = vmatprep.subr.mxu0 0.0
        %570 = vmatpush1.msra.mxu0 0.0
        %571 = vmatprep.subr.mxu0 0.0
        %572 = vmatpush1.msra.mxu0 0.0
        %573 = vmatprep.subr.mxu0 0.0
        %574 = vmatpush1.msra.mxu0 0.0
        %575 = vmatprep.subr.mxu0 0.0
        %576 = vmatpush1.msra.mxu0 0.0
        %577 = vmatprep.subr.mxu0 0.0
        %578 = vmatpush1.msra.mxu0 0.0
        %579 = vmatprep.subr.mxu0 0.0
        %580 = vmatpush1.msra.mxu0 0.0
        %581 = vmatprep.subr.mxu0 0.0
        %582 = vmatpush1.msra.mxu0 0.0
        %583 = vmatprep.subr.mxu0 0.0
        %584 = vmatpush1.msra.mxu0 0.0
        %585 = vmatprep.subr.mxu0 0.0
        %586 = vmatpush1.msra.mxu0 0.0
        %587 = vmatprep.subr.mxu0 0.0
        %588 = vmatpush1.msra.mxu0 0.0
        %589 = vmatprep.subr.mxu0 0.0
        %590 = vmatpush1.msra.mxu0 0.0
        %591 = vmatprep.subr.mxu0 0.0
        %592 = vmatpush1.msra.mxu0 0.0
        %593 = vmatprep.subr.mxu0 0.0
        %594 = vmatpush1.msra.mxu0 0.0
        %595 = vmatprep.subr.mxu0 0.0
        %596 = vmatpush1.msra.mxu0 0.0
        %597 = vmatprep.subr.mxu0 0.0
        %598 = vmatpush1.msra.mxu0 0.0
        %599 = vmatprep.subr.mxu0 0.0
        %600 = vmatpush1.msra.mxu0 0.0
        %601 = vmatprep.subr.mxu0 0.0
        %602 = vmatpush1.msra.mxu0 0.0
        %603 = vmatprep.subr.mxu0 0.0
        %604 = vmatpush1.msra.mxu0 0.0
        %605 = vmatprep.subr.mxu0 0.0
        %606 = vmatpush1.msra.mxu0 0.0
        %607 = vmatprep.subr.mxu0 0.0
        %608 = vmatpush1.msra.mxu0 0.0
        %609 = vmatprep.mubr.f32.mxu0 0.0
        %610 = vmatmul.mubr.f32.gmra.mrb[0].mxu0 %v543
        %v611 = vpop.f32.mrb[0].mxu0
        %v612 = vadd.f32 0.0, %v611
        %v613 = vpop.f32.mrb[0].mxu0
        %614 = vdwg.mxu0
        %v615 = vrcp.pop %v538
        %v616 = vmul.f32 %v612, %v615
        %617 = vrot.lane.b32.xlu0 %v284, 112
        %v618 = vpop.permute.xlu0 %617
        %619 = vrot.lane.b32.xlu0 %v282, 80
        %v620 = vpop.permute.xlu0 %619
        %v621 = vsel %vm288, %v618, 0
        %v623 = vsel %vm288, %v620, 0
        %625 = vmatprep.subr.mxu0 0.0
        %626 = vmatpush1.xpose.msra.mxu0 %v623
        %627 = vmatprep.subr.mxu0 0.0
        %628 = vmatpush1.xpose.msra.mxu0 0.0
        %629 = vmatprep.subr.mxu0 0.0
        %630 = vmatpush1.xpose.msra.mxu0 0.0
        %631 = vmatprep.subr.mxu0 0.0
        %632 = vmatpush1.xpose.msra.mxu0 0.0
        %633 = vmatprep.subr.mxu0 0.0
        %634 = vmatpush1.xpose.msra.mxu0 0.0
        %635 = vmatprep.subr.mxu0 0.0
        %636 = vmatpush1.xpose.msra.mxu0 0.0
        %637 = vmatprep.subr.mxu0 0.0
        %638 = vmatpush1.xpose.msra.mxu0 0.0
        %639 = vmatprep.subr.mxu0 0.0
        %640 = vmatpush1.xpose.msra.mxu0 0.0
        %641 = vmatprep.subr.mxu0 0.0
        %642 = vmatpush1.xpose.msra.mxu0 0.0
        %643 = vmatprep.subr.mxu0 0.0
        %644 = vmatpush1.xpose.msra.mxu0 0.0
        %645 = vmatprep.subr.mxu0 0.0
        %646 = vmatpush1.xpose.msra.mxu0 0.0
        %647 = vmatprep.subr.mxu0 0.0
        %648 = vmatpush1.xpose.msra.mxu0 0.0
        %649 = vmatprep.subr.mxu0 0.0
        %650 = vmatpush1.xpose.msra.mxu0 0.0
        %651 = vmatprep.subr.mxu0 0.0
        %652 = vmatpush1.xpose.msra.mxu0 0.0
        %653 = vmatprep.subr.mxu0 0.0
        %654 = vmatpush1.xpose.msra.mxu0 0.0
        %655 = vmatprep.subr.mxu0 0.0
        %656 = vmatpush1.xpose.msra.mxu0 0.0
        %657 = vmatprep.subr.mxu0 0.0
        %658 = vmatpush1.xpose.msra.mxu0 0.0
        %659 = vmatprep.subr.mxu0 0.0
        %660 = vmatpush1.xpose.msra.mxu0 0.0
        %661 = vmatprep.subr.mxu0 0.0
        %662 = vmatpush1.xpose.msra.mxu0 0.0
        %663 = vmatprep.subr.mxu0 0.0
        %664 = vmatpush1.xpose.msra.mxu0 0.0
        %665 = vmatprep.subr.mxu0 0.0
        %666 = vmatpush1.xpose.msra.mxu0 0.0
        %667 = vmatprep.subr.mxu0 0.0
        %668 = vmatpush1.xpose.msra.mxu0 0.0
        %669 = vmatprep.subr.mxu0 0.0
        %670 = vmatpush1.xpose.msra.mxu0 0.0
        %671 = vmatprep.subr.mxu0 0.0
        %672 = vmatpush1.xpose.msra.mxu0 0.0
        %673 = vmatprep.subr.mxu0 0.0
        %674 = vmatpush1.xpose.msra.mxu0 0.0
        %675 = vmatprep.subr.mxu0 0.0
        %676 = vmatpush1.xpose.msra.mxu0 0.0
        %677 = vmatprep.subr.mxu0 0.0
        %678 = vmatpush1.xpose.msra.mxu0 0.0
        %679 = vmatprep.subr.mxu0 0.0
        %680 = vmatpush1.xpose.msra.mxu0 0.0
        %681 = vmatprep.subr.mxu0 0.0
        %682 = vmatpush1.xpose.msra.mxu0 0.0
        %683 = vmatprep.subr.mxu0 0.0
        %684 = vmatpush1.xpose.msra.mxu0 0.0
        %685 = vmatprep.subr.mxu0 0.0
        %686 = vmatpush1.xpose.msra.mxu0 0.0
        %687 = vmatprep.subr.mxu0 0.0
        %688 = vmatpush1.xpose.msra.mxu0 0.0
        %689 = vmatprep.mubr.f32.mxu0 0.0
        %690 = vmatmul.mubr.f32.gmra.mrb[0].mxu0 %v621
        %v691 = vpop.f32.mrb[0].mxu0
        %v692 = vadd.f32 0.0, %v691
        %v693 = vpop.f32.mrb[0].mxu0
        %694 = vdwg.mxu0
        %v695 = vsel %vm288, %v692, -inf
        %696 = vmax.xlane.f32.xlu0 %v695
        %v697 = vpop.xlane.xlu0 %696
        %v698 = vsub.f32 %v692, %v697
        %v699 = vmul.f32 %v698, 1.442695
        %v700 = vpow.pop %v699
        %v701 = vsel %vm288, %v700, 0.0
        %702 = vadd.xlane.f32.xlu0 %v701
        %v703 = vpop.xlane.xlu0 %702
        %704 = vrot.lane.b32.xlu0 %v283, 48
        %v705 = vpop.permute.xlu0 %704
        %v708 = vsel %vm288, %v700, 0
        %710 = vmatprep.subr.mxu0 0.0
        %711 = vmatpush1.msra.mxu0 %v705
        %712 = vmatprep.subr.mxu0 0.0
        %713 = vmatpush1.msra.mxu0 0.0
        %714 = vmatprep.subr.mxu0 0.0
        %715 = vmatpush1.msra.mxu0 0.0
        %716 = vmatprep.subr.mxu0 0.0
        %717 = vmatpush1.msra.mxu0 0.0
        %718 = vmatprep.subr.mxu0 0.0
        %719 = vmatpush1.msra.mxu0 0.0
        %720 = vmatprep.subr.mxu0 0.0
        %721 = vmatpush1.msra.mxu0 0.0
        %722 = vmatprep.subr.mxu0 0.0
        %723 = vmatpush1.msra.mxu0 0.0
        %724 = vmatprep.subr.mxu0 0.0
        %725 = vmatpush1.msra.mxu0 0.0
        %726 = vmatprep.subr.mxu0 0.0
        %727 = vmatpush1.msra.mxu0 0.0
        %728 = vmatprep.subr.mxu0 0.0
        %729 = vmatpush1.msra.mxu0 0.0
        %730 = vmatprep.subr.mxu0 0.0
        %731 = vmatpush1.msra.mxu0 0.0
        %732 = vmatprep.subr.mxu0 0.0
        %733 = vmatpush1.msra.mxu0 0.0
        %734 = vmatprep.subr.mxu0 0.0
        %735 = vmatpush1.msra.mxu0 0.0
        %736 = vmatprep.subr.mxu0 0.0
        %737 = vmatpush1.msra.mxu0 0.0
        %738 = vmatprep.subr.mxu0 0.0
        %739 = vmatpush1.msra.mxu0 0.0
        %740 = vmatprep.subr.mxu0 0.0
        %741 = vmatpush1.msra.mxu0 0.0
        %742 = vmatprep.subr.mxu0 0.0
        %743 = vmatpush1.msra.mxu0 0.0
        %744 = vmatprep.subr.mxu0 0.0
        %745 = vmatpush1.msra.mxu0 0.0
        %746 = vmatprep.subr.mxu0 0.0
        %747 = vmatpush1.msra.mxu0 0.0
        %748 = vmatprep.subr.mxu0 0.0
        %749 = vmatpush1.msra.mxu0 0.0
        %750 = vmatprep.subr.mxu0 0.0
        %751 = vmatpush1.msra.mxu0 0.0
        %752 = vmatprep.subr.mxu0 0.0
        %753 = vmatpush1.msra.mxu0 0.0
        %754 = vmatprep.subr.mxu0 0.0
        %755 = vmatpush1.msra.mxu0 0.0
        %756 = vmatprep.subr.mxu0 0.0
        %757 = vmatpush1.msra.mxu0 0.0
        %758 = vmatprep.subr.mxu0 0.0
        %759 = vmatpush1.msra.mxu0 0.0
        %760 = vmatprep.subr.mxu0 0.0
        %761 = vmatpush1.msra.mxu0 0.0
        %762 = vmatprep.subr.mxu0 0.0
        %763 = vmatpush1.msra.mxu0 0.0
        %764 = vmatprep.subr.mxu0 0.0
        %765 = vmatpush1.msra.mxu0 0.0
        %766 = vmatprep.subr.mxu0 0.0
        %767 = vmatpush1.msra.mxu0 0.0
        %768 = vmatprep.subr.mxu0 0.0
        %769 = vmatpush1.msra.mxu0 0.0
        %770 = vmatprep.subr.mxu0 0.0
        %771 = vmatpush1.msra.mxu0 0.0
        %772 = vmatprep.subr.mxu0 0.0
        %773 = vmatpush1.msra.mxu0 0.0
        %774 = vmatprep.mubr.f32.mxu0 0.0
        %775 = vmatmul.mubr.f32.gmra.mrb[0].mxu0 %v708
        %v776 = vpop.f32.mrb[0].mxu0
        %v777 = vadd.f32 0.0, %v776
        %v778 = vpop.f32.mrb[0].mxu0
        %779 = vdwg.mxu0
        %v780 = vrcp.pop %v703
        %v781 = vmul.f32 %v777, %v780
        %782 = vrot.lane.b32.xlu0 %v284, 104
        %v783 = vpop.permute.xlu0 %782
        %784 = vrot.lane.b32.xlu0 %v282, 72
        %v785 = vpop.permute.xlu0 %784
        %v786 = vsel %vm288, %v783, 0
        %v788 = vsel %vm288, %v785, 0
        %790 = vmatprep.subr.mxu0 0.0
        %791 = vmatpush1.xpose.msra.mxu0 %v788
        %792 = vmatprep.subr.mxu0 0.0
        %793 = vmatpush1.xpose.msra.mxu0 0.0
        %794 = vmatprep.subr.mxu0 0.0
        %795 = vmatpush1.xpose.msra.mxu0 0.0
        %796 = vmatprep.subr.mxu0 0.0
        %797 = vmatpush1.xpose.msra.mxu0 0.0
        %798 = vmatprep.subr.mxu0 0.0
        %799 = vmatpush1.xpose.msra.mxu0 0.0
        %800 = vmatprep.subr.mxu0 0.0
        %801 = vmatpush1.xpose.msra.mxu0 0.0
        %802 = vmatprep.subr.mxu0 0.0
        %803 = vmatpush1.xpose.msra.mxu0 0.0
        %804 = vmatprep.subr.mxu0 0.0
        %805 = vmatpush1.xpose.msra.mxu0 0.0
        %806 = vmatprep.subr.mxu0 0.0
        %807 = vmatpush1.xpose.msra.mxu0 0.0
        %808 = vmatprep.subr.mxu0 0.0
        %809 = vmatpush1.xpose.msra.mxu0 0.0
        %810 = vmatprep.subr.mxu0 0.0
        %811 = vmatpush1.xpose.msra.mxu0 0.0
        %812 = vmatprep.subr.mxu0 0.0
        %813 = vmatpush1.xpose.msra.mxu0 0.0
        %814 = vmatprep.subr.mxu0 0.0
        %815 = vmatpush1.xpose.msra.mxu0 0.0
        %816 = vmatprep.subr.mxu0 0.0
        %817 = vmatpush1.xpose.msra.mxu0 0.0
        %818 = vmatprep.subr.mxu0 0.0
        %819 = vmatpush1.xpose.msra.mxu0 0.0
        %820 = vmatprep.subr.mxu0 0.0
        %821 = vmatpush1.xpose.msra.mxu0 0.0
        %822 = vmatprep.subr.mxu0 0.0
        %823 = vmatpush1.xpose.msra.mxu0 0.0
        %824 = vmatprep.subr.mxu0 0.0
        %825 = vmatpush1.xpose.msra.mxu0 0.0
        %826 = vmatprep.subr.mxu0 0.0
        %827 = vmatpush1.xpose.msra.mxu0 0.0
        %828 = vmatprep.subr.mxu0 0.0
        %829 = vmatpush1.xpose.msra.mxu0 0.0
        %830 = vmatprep.subr.mxu0 0.0
        %831 = vmatpush1.xpose.msra.mxu0 0.0
        %832 = vmatprep.subr.mxu0 0.0
        %833 = vmatpush1.xpose.msra.mxu0 0.0
        %834 = vmatprep.subr.mxu0 0.0
        %835 = vmatpush1.xpose.msra.mxu0 0.0
        %836 = vmatprep.subr.mxu0 0.0
        %837 = vmatpush1.xpose.msra.mxu0 0.0
        %838 = vmatprep.subr.mxu0 0.0
        %839 = vmatpush1.xpose.msra.mxu0 0.0
        %840 = vmatprep.subr.mxu0 0.0
        %841 = vmatpush1.xpose.msra.mxu0 0.0
        %842 = vmatprep.subr.mxu0 0.0
        %843 = vmatpush1.xpose.msra.mxu0 0.0
        %844 = vmatprep.subr.mxu0 0.0
        %845 = vmatpush1.xpose.msra.mxu0 0.0
        %846 = vmatprep.subr.mxu0 0.0
        %847 = vmatpush1.xpose.msra.mxu0 0.0
        %848 = vmatprep.subr.mxu0 0.0
        %849 = vmatpush1.xpose.msra.mxu0 0.0
        %850 = vmatprep.subr.mxu0 0.0
        %851 = vmatpush1.xpose.msra.mxu0 0.0
        %852 = vmatprep.subr.mxu0 0.0
        %853 = vmatpush1.xpose.msra.mxu0 0.0
        %854 = vmatprep.mubr.f32.mxu0 0.0
        %855 = vmatmul.mubr.f32.gmra.mrb[0].mxu0 %v786
        %v856 = vpop.f32.mrb[0].mxu0
        %v857 = vadd.f32 0.0, %v856
        %v858 = vpop.f32.mrb[0].mxu0
        %859 = vdwg.mxu0
        %v860 = vsel %vm288, %v857, -inf
        %861 = vmax.xlane.f32.xlu0 %v860
        %v862 = vpop.xlane.xlu0 %861
        %v863 = vsub.f32 %v857, %v862
        %v864 = vmul.f32 %v863, 1.442695
        %v865 = vpow.pop %v864
        %v866 = vsel %vm288, %v865, 0.0
        %867 = vadd.xlane.f32.xlu0 %v866
        %v868 = vpop.xlane.xlu0 %867
        %869 = vrot.lane.b32.xlu0 %v283, 40
        %v870 = vpop.permute.xlu0 %869
        %v873 = vsel %vm288, %v865, 0
        %875 = vmatprep.subr.mxu0 0.0
        %876 = vmatpush1.msra.mxu0 %v870
        %877 = vmatprep.subr.mxu0 0.0
        %878 = vmatpush1.msra.mxu0 0.0
        %879 = vmatprep.subr.mxu0 0.0
        %880 = vmatpush1.msra.mxu0 0.0
        %881 = vmatprep.subr.mxu0 0.0
        %882 = vmatpush1.msra.mxu0 0.0
        %883 = vmatprep.subr.mxu0 0.0
        %884 = vmatpush1.msra.mxu0 0.0
        %885 = vmatprep.subr.mxu0 0.0
        %886 = vmatpush1.msra.mxu0 0.0
        %887 = vmatprep.subr.mxu0 0.0
        %888 = vmatpush1.msra.mxu0 0.0
        %889 = vmatprep.subr.mxu0 0.0
        %890 = vmatpush1.msra.mxu0 0.0
        %891 = vmatprep.subr.mxu0 0.0
        %892 = vmatpush1.msra.mxu0 0.0
        %893 = vmatprep.subr.mxu0 0.0
        %894 = vmatpush1.msra.mxu0 0.0
        %895 = vmatprep.subr.mxu0 0.0
        %896 = vmatpush1.msra.mxu0 0.0
        %897 = vmatprep.subr.mxu0 0.0
        %898 = vmatpush1.msra.mxu0 0.0
        %899 = vmatprep.subr.mxu0 0.0
        %900 = vmatpush1.msra.mxu0 0.0
        %901 = vmatprep.subr.mxu0 0.0
        %902 = vmatpush1.msra.mxu0 0.0
        %903 = vmatprep.subr.mxu0 0.0
        %904 = vmatpush1.msra.mxu0 0.0
        %905 = vmatprep.subr.mxu0 0.0
        %906 = vmatpush1.msra.mxu0 0.0
        %907 = vmatprep.subr.mxu0 0.0
        %908 = vmatpush1.msra.mxu0 0.0
        %909 = vmatprep.subr.mxu0 0.0
        %910 = vmatpush1.msra.mxu0 0.0
        %911 = vmatprep.subr.mxu0 0.0
        %912 = vmatpush1.msra.mxu0 0.0
        %913 = vmatprep.subr.mxu0 0.0
        %914 = vmatpush1.msra.mxu0 0.0
        %915 = vmatprep.subr.mxu0 0.0
        %916 = vmatpush1.msra.mxu0 0.0
        %917 = vmatprep.subr.mxu0 0.0
        %918 = vmatpush1.msra.mxu0 0.0
        %919 = vmatprep.subr.mxu0 0.0
        %920 = vmatpush1.msra.mxu0 0.0
        %921 = vmatprep.subr.mxu0 0.0
        %922 = vmatpush1.msra.mxu0 0.0
        %923 = vmatprep.subr.mxu0 0.0
        %924 = vmatpush1.msra.mxu0 0.0
        %925 = vmatprep.subr.mxu0 0.0
        %926 = vmatpush1.msra.mxu0 0.0
        %927 = vmatprep.subr.mxu0 0.0
        %928 = vmatpush1.msra.mxu0 0.0
        %929 = vmatprep.subr.mxu0 0.0
        %930 = vmatpush1.msra.mxu0 0.0
        %931 = vmatprep.subr.mxu0 0.0
        %932 = vmatpush1.msra.mxu0 0.0
        %933 = vmatprep.subr.mxu0 0.0
        %934 = vmatpush1.msra.mxu0 0.0
        %935 = vmatprep.subr.mxu0 0.0
        %936 = vmatpush1.msra.mxu0 0.0
        %937 = vmatprep.subr.mxu0 0.0
        %938 = vmatpush1.msra.mxu0 0.0
        %939 = vmatprep.mubr.f32.mxu0 0.0
        %940 = vmatmul.mubr.f32.gmra.mrb[0].mxu0 %v873
        %v941 = vpop.f32.mrb[0].mxu0
        %v942 = vadd.f32 0.0, %v941
        %v943 = vpop.f32.mrb[0].mxu0
        %944 = vdwg.mxu0
        %v945 = vrcp.pop %v868
        %v946 = vmul.f32 %v942, %v945
        %948 = vrot.lane.b32.xlu0 %v616, 8
        %v949 = vpop.permute.xlu0 %948
        %952 = vrot.lane.b32.xlu0 %v781, 16
        %v953 = vpop.permute.xlu0 %952
        %956 = vrot.lane.b32.xlu0 %v946, 24
        %v957 = vpop.permute.xlu0 %956
        %v959 = vsel %vm288, %v451, %v949
        %vm960 = vcmask 130048
        %v961 = vsel %vm960, %v959, %v953
        %vm962 = vcmask 195584
        %v963 = vsel %vm962, %v961, %v957
        %vm964 = vcmask 261120
        %965 = vst.msk [vmem:[%s280] sm:$0xff] %vm964, %v963
        %s966 = sand.u32 %s132, 1
        %s967 = scalar_lea.sflag [#allocation4], %s966
        %s968 = sand.u32 %s132, 1
        %s969 = smul.addr %s968, 8
        %s970 = scalar_lea.vmem [#allocation8], %s969
        // Predicated region
        $region45: #{clip_attention_fwd.4} parent=31 // pred_check
          %p971 = pneg %p142
        $region46: #{clip_attention_fwd.4} parent=31 // pred_check_branch
          %973 = sbr.rel (%p971) target = $region48
        $region47: #{clip_attention_fwd.4} parent=31 // pred_region
          %s975 = ssub.s32 128, 128
          %976 = vsyncadd %s967, %s975
          %s977 = sadd.s32 %s30, %s28
          %s978 = smul.addr %s977, 128
          %s979 = scalar_lea.hbm %s3, %s978
          %s981 = sshll.u32 %s970, 4
          %s982 = int_to_ptr.vmem [resolvable:$true] %s981
          %984 = dma.vmem_to_hbm [thread:$0]  %s982, 128, %s979, %s967
        $region48: #{clip_attention_fwd.4} parent=31 // pred_fallthru
          _
      $region32: #{clip_attention_fwd.4} parent=5 // pred_fallthru
        _
      %p985 = scmp.le.s32.totalorder 2, %s18
      // Predicated region
      $region49: #{clip_attention_fwd.4} parent=5 // pred_check
        %p986 = pneg %p985
      $region50: #{clip_attention_fwd.4} parent=5 // pred_check_branch
        %988 = sbr.rel (%p986) target = $region52
      $region51: #{clip_attention_fwd.4} parent=5 // pred_region
        %s989 = ssub.s32 %s18, 2
        // Predicated region
        $region53: #{clip_attention_fwd.4} parent=51 // pred_check
          %p990 = pneg %p148
        $region54: #{clip_attention_fwd.4} parent=51 // pred_check_branch
          %992 = sbr.rel (%p990) target = $region56
        $region55: #{clip_attention_fwd.4} parent=51 // pred_region
          %s993 = sand.u32 %s133, 1
          %s994 = scalar_lea.sflag [#allocation4], %s993
          %s995 = sand.u32 %s133, 1
          %s996 = smul.addr %s995, 8
          %s997 = scalar_lea.vmem [#allocation8], %s996
          %998 = dma.done %s994, 128
        $region56: #{clip_attention_fwd.4} parent=51 // pred_fallthru
          _
      $region52: #{clip_attention_fwd.4} parent=5 // pred_fallthru
        _
    $region6: #{clip_attention_fwd.4} parent=1 // loop_footer
      %s22 = sadd.s32 1, %s18
    $region7: #{clip_attention_fwd.4} parent=1 // loop_footer_branch
      %17 = sbr.rel target = $region3
    $region8: #{clip_attention_fwd.4} parent=1 // loop_exit
      _
    %999 = vsyncpa [#allocation3], 1
    %s1000 = scalar_lea.sflag [#allocation3], 1
    %1001 = vsyncpa %s1000, 1
    %1002 = vsyncpa [#allocation6], 1
    %s1003 = scalar_lea.sflag [#allocation6], 1
    %1004 = vsyncpa %s1003, 1
    %1005 = vsyncpa [#allocation4], 1
    %s1006 = scalar_lea.sflag [#allocation4], 1
    %1007 = vsyncpa %s1006, 1

</llo_original>
